<compile_context>
chip_gen: v7x
topology: tpu7x:2x2x1
jax: 0.10.0
libtpu: 0.0.40
codegen_flags: <defaults>
</compile_context>

<pallas_src>
import jax
import jax.numpy as jnp
from jax.experimental import pallas as pl
from jax.experimental.pallas import tpu as pltpu


def _discriminator_kernel(x_ref, y_ref,
                          w1x_ref, w1y_ref, b1_ref,
                          w2_ref, b2_ref,
                          w3_ref, b3_ref,
                          w4_ref, b4_ref,
                          w5_ref, b5_ref,
                          out_ref):
    cd = w1x_ref.dtype   # compute dtype of MXU operands / elementwise math

    def lrelu(v):
        # leaky_relu(v, 0.2) == max(v, 0.2*v): mul+max (2 VALU ops) instead of
        # the mul+cmp+select (3 ops) that jnp.where lowers to.
        return jnp.maximum(v, 0.2 * v)

    x = x_ref[...]   # (bm, C)  already in the compute dtype (cast in wrapper)
    y = y_ref[...]   # (bm, 1)  f32

    # Layer 1 with the (x | y) concat folded in:
    #   [x | y] @ W1 == x @ W1[:C]  +  y * W1[C]   (rank-1 y term on the VPU)
    acc = jnp.dot(x, w1x_ref[...], preferred_element_type=jnp.float32)
    acc = acc + y * w1y_ref[...]
    h = lrelu(acc.astype(cd) + b1_ref[...])

    # Layers 2..4: compute-dtype MXU matmul, f32 accumulation, bias + lrelu in
    # the compute dtype (packed bf16 vregs halve VALU work on v6e/v7x).
    h = lrelu(jnp.dot(h, w2_ref[...],
                      preferred_element_type=jnp.float32).astype(cd)
              + b2_ref[...])
    h = lrelu(jnp.dot(h, w3_ref[...],
                      preferred_element_type=jnp.float32).astype(cd)
              + b3_ref[...])
    h = lrelu(jnp.dot(h, w4_ref[...],
                      preferred_element_type=jnp.float32).astype(cd)
              + b4_ref[...])

    # Final N=1 layer as a lane (XLU) reduction instead of a 1-column MXU
    # matmul; b5 is a scalar living in SMEM.
    logits = jnp.sum(h.astype(jnp.float32) * w5_ref[...],
                     axis=-1, keepdims=True) + b5_ref[0, 0]

    # Exact sigmoid on the tiny (bm, 1) column: exp hits the EUP, and one
    # exact divide on bm elements is free compared to the approx-recip error.
    out_ref[...] = 1.0 / (1.0 + jnp.exp(-logits))
    # TODO(synk): for very large B, emit a lane-dense (1, bm) output block
    # instead of this (bm, 1) column to avoid masked vst.msk partial stores.


def _padded_tile_bytes(rows, cols, itemsize):
    """VMEM footprint of a (rows, cols) tile after (8, 128) layout padding."""
    return (-(-rows // 8) * 8) * (-(-cols // 128) * 128) * itemsize


def discriminator_forward(x, y, params, *, block_m=512,
                          compute_dtype=jnp.bfloat16):
    """x: [B, input_size], y: [B, 1] -> sigmoid probabilities [B, 1] float32.

    block_m:       batch tile.  512 on all generations (v5e included); the
                   activations are tiny so VMEM is not the constraint and
                   taller M tiles amortize per-grid-step overhead.
    compute_dtype: dtype of MXU operands and elementwise math.  bf16 (default)
                   = native MXU rate on v5e/v6e/v7x; f32 for tight checks.
                   Accumulation is always f32.
    """
    (w1, b1), (w2, b2), (w3, b3), (w4, b4), (w5, b5) = params
    B, C = x.shape
    L = w1.shape[1]
    cd = compute_dtype
    cd_b = jnp.dtype(cd).itemsize

    # Weight-only preprocessing (constant-folded / done once inside a jitted
    # training step): split W1 so the concat folds into the kernel, transpose
    # w5 so the last layer is a lane reduction, cast MXU operands and biases
    # to the compute dtype.
    w1x = w1[:C].astype(cd)                           # (C, L)  MXU operand
    w1y = w1[C:].astype(jnp.float32)                  # (1, L)  rank-1 y term
    b1c = b1.astype(cd)
    w2c, b2c = w2.astype(cd), b2.astype(cd)
    w3c, b3c = w3.astype(cd), b3.astype(cd)
    w4c, b4c = w4.astype(cd), b4.astype(cd)
    w5r = w5.T.astype(jnp.float32)                    # (1, L)  XLU reduce row
    b5s = jnp.asarray(b5, jnp.float32).reshape(1, 1)  # scalar -> SMEM

    # Batch tile: whole batch if it fits, else block_m (ragged last block is
    # handled by masked output writes; exp of padded garbage rows is harmless).
    bm = B if B <= block_m else block_m
    grid = (pl.cdiv(B, bm),)

    # Explicit scoped-VMEM budget from the real (padded) footprint: weights
    # (x2 in case the pipeline_mode fallback double-buffers them), double-
    # buffered activations/outputs, live intermediates, plus headroom.
    # Clamped to [32 MiB default, 64 MiB v7x physical].
    weight_bytes = (_padded_tile_bytes(C, L, cd_b)
                    + 3 * _padded_tile_bytes(L, L, cd_b)
                    + 4 * _padded_tile_bytes(1, L, cd_b)
                    + 2 * _padded_tile_bytes(1, L, 4))
    act_bytes = 2 * (_padded_tile_bytes(bm, C, cd_b)
                     + 2 * _padded_tile_bytes(bm, 1, 4))
    live_bytes = 6 * _padded_tile_bytes(bm, L, 4)
    vmem_limit = int(min(max(2 * weight_bytes + act_bytes + live_bytes
                             + (2 << 20), 32 << 20), 64 << 20))
    # TODO(synk): for latent sizes whose weights exceed this clamp, switch to
    # per-layer (M, N, K) tiling with an "arbitrary" reduction axis + VMEM f32
    # accumulator instead of whole-weight residency.

    flops = 2 * B * (C * L + 3 * L * L + 2 * L)
    bytes_accessed = weight_bytes + B * C * cd_b + 2 * 4 * B
    cost = pl.CostEstimate(flops=flops, transcendentals=B,
                           bytes_accessed=bytes_accessed)

    args = (x.astype(cd), y.astype(jnp.float32),
            w1x, w1y, b1c, w2c, b2c, w3c, b3c, w4c, b4c, w5r, b5s)

    def build(single_buffer_weights):
        def act_spec(last):
            return pl.BlockSpec((bm, last), lambda i: (i, 0))

        def res_spec(shape):
            # Grid-invariant weights (index_map -> (0,0)): single-buffer them
            # so they don't burn 2x VMEM for nothing.
            if single_buffer_weights:
                return pl.BlockSpec(shape, lambda i: (0, 0),
                                    pipeline_mode=pl.Buffered(1))
            return pl.BlockSpec(shape, lambda i: (0, 0))

        in_specs = [
            act_spec(C),                                        # x
            act_spec(1),                                        # y
            res_spec((C, L)),                                   # w1x
            res_spec((1, L)),                                   # w1y
            res_spec((1, L)),                                   # b1
            res_spec((L, L)),                                   # w2
            res_spec((1, L)),                                   # b2
            res_spec((L, L)),                                   # w3
            res_spec((1, L)),                                   # b3
            res_spec((L, L)),                                   # w4
            res_spec((1, L)),                                   # b4
            res_spec((1, L)),                                   # w5 row
            pl.BlockSpec(memory_space=pltpu.MemorySpace.SMEM),  # b5 scalar
        ]
        return pl.pallas_call(
            _discriminator_kernel,
            out_shape=jax.ShapeDtypeStruct((B, 1), jnp.float32),
            grid=grid,
            in_specs=in_specs,
            out_specs=pl.BlockSpec((bm, 1), lambda i: (i, 0)),
            compiler_params=pltpu.CompilerParams(
                dimension_semantics=("parallel",),
                vmem_limit_bytes=vmem_limit),
            cost_estimate=cost,
        )

    try:
        return build(single_buffer_weights=True)(*args)
    except Exception:
        # Defensive: if this jax build rejects pipeline_mode on a top-level
        # pallas_call, fall back to default (double-buffered) weight residency.
        return build(single_buffer_weights=False)(*args)


def init_params(key, input_size, latent_size):
    """PyTorch-Linear-style uniform(-1/sqrt(fan_in), 1/sqrt(fan_in)) init."""
    dims = [(input_size + 1, latent_size),
            (latent_size, latent_size),
            (latent_size, latent_size),
            (latent_size, latent_size),
            (latent_size, 1)]
    params = []
    for (fan_in, fan_out) in dims:
        key, kw, kb = jax.random.split(key, 3)
        bound = 1.0 / jnp.sqrt(jnp.float32(fan_in))
        w = jax.random.uniform(kw, (fan_in, fan_out), jnp.float32, -bound, bound)
        b = jax.random.uniform(kb, (1, fan_out), jnp.float32, -bound, bound)
        params.append((w, b))
    return params


def reference_forward(x, y, params):
    """Pure-JAX reference (mirrors the PyTorch forward exactly)."""
    h = jnp.concatenate([x, y], axis=1).astype(jnp.float32)
    for i, (w, b) in enumerate(params):
        h = h @ w + b
        if i < 4:
            h = jnp.where(h > 0, h, 0.2 * h)
    return jax.nn.sigmoid(h)


if __name__ == "__main__":
    # Small shapes consistent with the module: input_size=31 (concat dim 32),
    # latent_size=128, batch=8.
    B, INPUT_SIZE, LATENT = 8, 31, 128

    key = jax.random.PRNGKey(0)
    key, kx, ky = jax.random.split(key, 3)
    x = jax.random.normal(kx, (B, INPUT_SIZE), jnp.float32)
    y = jax.random.normal(ky, (B, 1), jnp.float32)
    params = init_params(key, INPUT_SIZE, LATENT)

    ref = reference_forward(x, y, params)

    # Default shipping path: bf16 MXU operands, f32 accumulation.
    out_bf16 = jax.block_until_ready(discriminator_forward(x, y, params))
    assert out_bf16.shape == (B, 1)
    assert jnp.allclose(out_bf16, ref, atol=3e-2, rtol=3e-2), \
        "bf16 path mismatch vs reference"

    # f32 path for a tight numerical check.
    out_f32 = jax.block_until_ready(
        discriminator_forward(x, y, params, compute_dtype=jnp.float32))
    assert out_f32.shape == (B, 1)
    assert jnp.allclose(out_f32, ref, atol=1e-3, rtol=1e-3), \
        "f32 path mismatch vs reference"

    print("KERNEL_OK")
</pallas_src>

<mosaic_0001>
module attributes {stable_mosaic.version = 11 : i64} {
  func.func @_discriminator_kernel(%arg0: i32, %arg1: memref<8x31xbf16, #tpu.memory_space<vmem>>, %arg2: memref<8x1xf32, #tpu.memory_space<vmem>>, %arg3: memref<31x128xbf16, #tpu.memory_space<vmem>>, %arg4: memref<1x128xf32, #tpu.memory_space<vmem>>, %arg5: memref<1x128xbf16, #tpu.memory_space<vmem>>, %arg6: memref<128x128xbf16, #tpu.memory_space<vmem>>, %arg7: memref<1x128xbf16, #tpu.memory_space<vmem>>, %arg8: memref<128x128xbf16, #tpu.memory_space<vmem>>, %arg9: memref<1x128xbf16, #tpu.memory_space<vmem>>, %arg10: memref<128x128xbf16, #tpu.memory_space<vmem>>, %arg11: memref<1x128xbf16, #tpu.memory_space<vmem>>, %arg12: memref<1x128xf32, #tpu.memory_space<vmem>>, %arg13: memref<1x1xf32, #tpu.memory_space<smem>>, %arg14: memref<8x1xf32, #tpu.memory_space<vmem>>) attributes {dimension_semantics = [#tpu.dimension_semantics<parallel>], iteration_bounds = array<i64: 1>, scalar_prefetch = 0 : i64, scratch_operands = 0 : i64, tpu.core_type = #tpu.core_type<tc>, window_params = [{transform_indices = @transform_0, window_bounds = array<i64: 8, 31>}, {transform_indices = @transform_1, window_bounds = array<i64: 8, 1>}, {pipeline_mode = #tpu.pipeline_mode<synchronous>, transform_indices = @transform_2, window_bounds = array<i64: 31, 128>}, {pipeline_mode = #tpu.pipeline_mode<synchronous>, transform_indices = @transform_3, window_bounds = array<i64: 1, 128>}, {pipeline_mode = #tpu.pipeline_mode<synchronous>, transform_indices = @transform_4, window_bounds = array<i64: 1, 128>}, {pipeline_mode = #tpu.pipeline_mode<synchronous>, transform_indices = @transform_5, window_bounds = array<i64: 128, 128>}, {pipeline_mode = #tpu.pipeline_mode<synchronous>, transform_indices = @transform_6, window_bounds = array<i64: 1, 128>}, {pipeline_mode = #tpu.pipeline_mode<synchronous>, transform_indices = @transform_7, window_bounds = array<i64: 128, 128>}, {pipeline_mode = #tpu.pipeline_mode<synchronous>, transform_indices = @transform_8, window_bounds = array<i64: 1, 128>}, {pipeline_mode = #tpu.pipeline_mode<synchronous>, transform_indices = @transform_9, window_bounds = array<i64: 128, 128>}, {pipeline_mode = #tpu.pipeline_mode<synchronous>, transform_indices = @transform_10, window_bounds = array<i64: 1, 128>}, {pipeline_mode = #tpu.pipeline_mode<synchronous>, transform_indices = @transform_11, window_bounds = array<i64: 1, 128>}, {transform_indices = @transform_12, window_bounds = array<i64: 1, 1>}, {transform_indices = @transform_13, window_bounds = array<i64: 8, 1>}]} {
    %c0 = arith.constant 0 : index
    %c0_0 = arith.constant 0 : index
    %0 = vector.load %arg1[%c0, %c0_0] : memref<8x31xbf16, #tpu.memory_space<vmem>>, vector<8x31xbf16>
    %c0_1 = arith.constant 0 : index
    %c0_2 = arith.constant 0 : index
    %1 = vector.load %arg2[%c0_1, %c0_2] : memref<8x1xf32, #tpu.memory_space<vmem>>, vector<8x1xf32>
    %c0_3 = arith.constant 0 : index
    %c0_4 = arith.constant 0 : index
    %2 = vector.load %arg3[%c0_3, %c0_4] : memref<31x128xbf16, #tpu.memory_space<vmem>>, vector<31x128xbf16>
    %cst = arith.constant dense<0.000000e+00> : vector<8x128xf32>
    %3 = tpu.matmul %0, %2, %cst {dimension_numbers = #tpu.dot_dimension_numbers<[1], [0], [0], [1], [0, 0, 1, 1], [], []>} : vector<8x31xbf16>, vector<31x128xbf16>, vector<8x128xf32> -> vector<8x128xf32>
    %c0_5 = arith.constant 0 : index
    %c0_6 = arith.constant 0 : index
    %4 = vector.load %arg4[%c0_5, %c0_6] : memref<1x128xf32, #tpu.memory_space<vmem>>, vector<1x128xf32>
    %5 = vector.broadcast %1 : vector<8x1xf32> to vector<8x128xf32>
    %6 = vector.broadcast %4 : vector<1x128xf32> to vector<8x128xf32>
    %7 = arith.mulf %5, %6 : vector<8x128xf32>
    %8 = arith.addf %3, %7 : vector<8x128xf32>
    %9 = arith.truncf %8 : vector<8x128xf32> to vector<8x128xbf16>
    %c0_7 = arith.constant 0 : index
    %c0_8 = arith.constant 0 : index
    %10 = vector.load %arg5[%c0_7, %c0_8] : memref<1x128xbf16, #tpu.memory_space<vmem>>, vector<1x128xbf16>
    %11 = vector.broadcast %10 : vector<1x128xbf16> to vector<8x128xbf16>
    %12 = arith.addf %9, %11 : vector<8x128xbf16>
    %cst_9 = arith.constant 2.001950e-01 : bf16
    %13 = vector.broadcast %cst_9 : bf16 to vector<8x128xbf16>
    %14 = arith.mulf %13, %12 : vector<8x128xbf16>
    %15 = arith.maximumf %12, %14 : vector<8x128xbf16>
    %c0_10 = arith.constant 0 : index
    %c0_11 = arith.constant 0 : index
    %16 = vector.load %arg6[%c0_10, %c0_11] : memref<128x128xbf16, #tpu.memory_space<vmem>>, vector<128x128xbf16>
    %cst_12 = arith.constant dense<0.000000e+00> : vector<8x128xf32>
    %17 = tpu.matmul %15, %16, %cst_12 {dimension_numbers = #tpu.dot_dimension_numbers<[1], [0], [0], [1], [0, 0, 1, 1], [], []>} : vector<8x128xbf16>, vector<128x128xbf16>, vector<8x128xf32> -> vector<8x128xf32>
    %18 = arith.truncf %17 : vector<8x128xf32> to vector<8x128xbf16>
    %c0_13 = arith.constant 0 : index
    %c0_14 = arith.constant 0 : index
    %19 = vector.load %arg7[%c0_13, %c0_14] : memref<1x128xbf16, #tpu.memory_space<vmem>>, vector<1x128xbf16>
    %20 = vector.broadcast %19 : vector<1x128xbf16> to vector<8x128xbf16>
    %21 = arith.addf %18, %20 : vector<8x128xbf16>
    %cst_15 = arith.constant 2.001950e-01 : bf16
    %22 = vector.broadcast %cst_15 : bf16 to vector<8x128xbf16>
    %23 = arith.mulf %22, %21 : vector<8x128xbf16>
    %24 = arith.maximumf %21, %23 : vector<8x128xbf16>
    %c0_16 = arith.constant 0 : index
    %c0_17 = arith.constant 0 : index
    %25 = vector.load %arg8[%c0_16, %c0_17] : memref<128x128xbf16, #tpu.memory_space<vmem>>, vector<128x128xbf16>
    %cst_18 = arith.constant dense<0.000000e+00> : vector<8x128xf32>
    %26 = tpu.matmul %24, %25, %cst_18 {dimension_numbers = #tpu.dot_dimension_numbers<[1], [0], [0], [1], [0, 0, 1, 1], [], []>} : vector<8x128xbf16>, vector<128x128xbf16>, vector<8x128xf32> -> vector<8x128xf32>
    %27 = arith.truncf %26 : vector<8x128xf32> to vector<8x128xbf16>
    %c0_19 = arith.constant 0 : index
    %c0_20 = arith.constant 0 : index
    %28 = vector.load %arg9[%c0_19, %c0_20] : memref<1x128xbf16, #tpu.memory_space<vmem>>, vector<1x128xbf16>
    %29 = vector.broadcast %28 : vector<1x128xbf16> to vector<8x128xbf16>
    %30 = arith.addf %27, %29 : vector<8x128xbf16>
    %cst_21 = arith.constant 2.001950e-01 : bf16
    %31 = vector.broadcast %cst_21 : bf16 to vector<8x128xbf16>
    %32 = arith.mulf %31, %30 : vector<8x128xbf16>
    %33 = arith.maximumf %30, %32 : vector<8x128xbf16>
    %c0_22 = arith.constant 0 : index
    %c0_23 = arith.constant 0 : index
    %34 = vector.load %arg10[%c0_22, %c0_23] : memref<128x128xbf16, #tpu.memory_space<vmem>>, vector<128x128xbf16>
    %cst_24 = arith.constant dense<0.000000e+00> : vector<8x128xf32>
    %35 = tpu.matmul %33, %34, %cst_24 {dimension_numbers = #tpu.dot_dimension_numbers<[1], [0], [0], [1], [0, 0, 1, 1], [], []>} : vector<8x128xbf16>, vector<128x128xbf16>, vector<8x128xf32> -> vector<8x128xf32>
    %36 = arith.truncf %35 : vector<8x128xf32> to vector<8x128xbf16>
    %c0_25 = arith.constant 0 : index
    %c0_26 = arith.constant 0 : index
    %37 = vector.load %arg11[%c0_25, %c0_26] : memref<1x128xbf16, #tpu.memory_space<vmem>>, vector<1x128xbf16>
    %38 = vector.broadcast %37 : vector<1x128xbf16> to vector<8x128xbf16>
    %39 = arith.addf %36, %38 : vector<8x128xbf16>
    %cst_27 = arith.constant 2.001950e-01 : bf16
    %40 = vector.broadcast %cst_27 : bf16 to vector<8x128xbf16>
    %41 = arith.mulf %40, %39 : vector<8x128xbf16>
    %42 = arith.maximumf %39, %41 : vector<8x128xbf16>
    %43 = arith.extf %42 : vector<8x128xbf16> to vector<8x128xf32>
    %c0_28 = arith.constant 0 : index
    %c0_29 = arith.constant 0 : index
    %44 = vector.load %arg12[%c0_28, %c0_29] : memref<1x128xf32, #tpu.memory_space<vmem>>, vector<1x128xf32>
    %45 = vector.broadcast %44 : vector<1x128xf32> to vector<8x128xf32>
    %46 = arith.mulf %43, %45 : vector<8x128xf32>
    %cst_30 = arith.constant dense<0.000000e+00> : vector<8xf32>
    %47 = vector.multi_reduction <add>, %46, %cst_30 [1] : vector<8x128xf32> to vector<8xf32>
    %48 = vector.shape_cast %47 : vector<8xf32> to vector<8x1xf32>
    %c0_31 = arith.constant 0 : index
    %c0_32 = arith.constant 0 : index
    %49 = memref.load %arg13[%c0_31, %c0_32] : memref<1x1xf32, #tpu.memory_space<smem>>
    %50 = vector.broadcast %49 : f32 to vector<8x1xf32>
    %51 = arith.addf %48, %50 : vector<8x1xf32>
    %cst_33 = arith.constant 0.000000e+00 : f32
    %52 = vector.broadcast %cst_33 : f32 to vector<8x1xf32>
    %53 = arith.subf %52, %51 : vector<8x1xf32>
    %54 = math.exp %53 : vector<8x1xf32>
    %cst_34 = arith.constant 1.000000e+00 : f32
    %55 = vector.broadcast %cst_34 : f32 to vector<8x1xf32>
    %56 = arith.addf %55, %54 : vector<8x1xf32>
    %cst_35 = arith.constant 1.000000e+00 : f32
    %57 = vector.broadcast %cst_35 : f32 to vector<8x1xf32>
    %58 = arith.divf %57, %56 : vector<8x1xf32>
    %c0_36 = arith.constant 0 : index
    %c0_37 = arith.constant 0 : index
    %59 = vector.load %arg14[%c0_36, %c0_37] : memref<8x1xf32, #tpu.memory_space<vmem>>, vector<8x1xf32>
    tpu.vector_store %arg14[%c0_36, %c0_37], %58 {strides = array<i32>} : memref<8x1xf32, #tpu.memory_space<vmem>>, vector<8x1xf32>,
    return
  }
  func.func @transform_0(%arg0: i32) -> (i32, i32) {
    %c0_i32 = arith.constant 0 : i32
    %c0_i32_0 = arith.constant 0 : i32
    return %arg0, %c0_i32 : i32, i32
  }
  func.func @transform_1(%arg0: i32) -> (i32, i32) {
    %c0_i32 = arith.constant 0 : i32
    %c0_i32_0 = arith.constant 0 : i32
    return %arg0, %c0_i32 : i32, i32
  }
  func.func @transform_2(%arg0: i32) -> (i32, i32) {
    %c0_i32 = arith.constant 0 : i32
    %c0_i32_0 = arith.constant 0 : i32
    %c0_i32_1 = arith.constant 0 : i32
    return %c0_i32, %c0_i32_0 : i32, i32
  }
  func.func @transform_3(%arg0: i32) -> (i32, i32) {
    %c0_i32 = arith.constant 0 : i32
    %c0_i32_0 = arith.constant 0 : i32
    %c0_i32_1 = arith.constant 0 : i32
    return %c0_i32, %c0_i32_0 : i32, i32
  }
  func.func @transform_4(%arg0: i32) -> (i32, i32) {
    %c0_i32 = arith.constant 0 : i32
    %c0_i32_0 = arith.constant 0 : i32
    %c0_i32_1 = arith.constant 0 : i32
    return %c0_i32, %c0_i32_0 : i32, i32
  }
  func.func @transform_5(%arg0: i32) -> (i32, i32) {
    %c0_i32 = arith.constant 0 : i32
    %c0_i32_0 = arith.constant 0 : i32
    %c0_i32_1 = arith.constant 0 : i32
    return %c0_i32, %c0_i32_0 : i32, i32
  }
  func.func @transform_6(%arg0: i32) -> (i32, i32) {
    %c0_i32 = arith.constant 0 : i32
    %c0_i32_0 = arith.constant 0 : i32
    %c0_i32_1 = arith.constant 0 : i32
    return %c0_i32, %c0_i32_0 : i32, i32
  }
  func.func @transform_7(%arg0: i32) -> (i32, i32) {
    %c0_i32 = arith.constant 0 : i32
    %c0_i32_0 = arith.constant 0 : i32
    %c0_i32_1 = arith.constant 0 : i32
    return %c0_i32, %c0_i32_0 : i32, i32
  }
  func.func @transform_8(%arg0: i32) -> (i32, i32) {
    %c0_i32 = arith.constant 0 : i32
    %c0_i32_0 = arith.constant 0 : i32
    %c0_i32_1 = arith.constant 0 : i32
    return %c0_i32, %c0_i32_0 : i32, i32
  }
  func.func @transform_9(%arg0: i32) -> (i32, i32) {
    %c0_i32 = arith.constant 0 : i32
    %c0_i32_0 = arith.constant 0 : i32
    %c0_i32_1 = arith.constant 0 : i32
    return %c0_i32, %c0_i32_0 : i32, i32
  }
  func.func @transform_10(%arg0: i32) -> (i32, i32) {
    %c0_i32 = arith.constant 0 : i32
    %c0_i32_0 = arith.constant 0 : i32
    %c0_i32_1 = arith.constant 0 : i32
    return %c0_i32, %c0_i32_0 : i32, i32
  }
  func.func @transform_11(%arg0: i32) -> (i32, i32) {
    %c0_i32 = arith.constant 0 : i32
    %c0_i32_0 = arith.constant 0 : i32
    %c0_i32_1 = arith.constant 0 : i32
    return %c0_i32, %c0_i32_0 : i32, i32
  }
  func.func @transform_12(%arg0: i32) -> (i32, i32) {
    %c0_i32 = arith.constant 0 : i32
    %c0_i32_0 = arith.constant 0 : i32
    %c0_i32_1 = arith.constant 0 : i32
    return %c0_i32, %c0_i32_0 : i32, i32
  }
  func.func @transform_13(%arg0: i32) -> (i32, i32) {
    %c0_i32 = arith.constant 0 : i32
    %c0_i32_0 = arith.constant 0 : i32
    return %arg0, %c0_i32 : i32, i32
  }
}

module attributes {stable_mosaic.version = 11 : i64} {
  func.func @_discriminator_kernel(%arg0: i32, %arg1: memref<8x31xbf16, #tpu.memory_space<vmem>>, %arg2: memref<8x1xf32, #tpu.memory_space<vmem>>, %arg3: memref<31x128xbf16, #tpu.memory_space<vmem>>, %arg4: memref<1x128xf32, #tpu.memory_space<vmem>>, %arg5: memref<1x128xbf16, #tpu.memory_space<vmem>>, %arg6: memref<128x128xbf16, #tpu.memory_space<vmem>>, %arg7: memref<1x128xbf16, #tpu.memory_space<vmem>>, %arg8: memref<128x128xbf16, #tpu.memory_space<vmem>>, %arg9: memref<1x128xbf16, #tpu.memory_space<vmem>>, %arg10: memref<128x128xbf16, #tpu.memory_space<vmem>>, %arg11: memref<1x128xbf16, #tpu.memory_space<vmem>>, %arg12: memref<1x128xf32, #tpu.memory_space<vmem>>, %arg13: memref<1x1xf32, #tpu.memory_space<smem>>, %arg14: memref<8x1xf32, #tpu.memory_space<vmem>>) attributes {dimension_semantics = [#tpu.dimension_semantics<parallel>], iteration_bounds = array<i64: 1>, scalar_prefetch = 0 : i64, scratch_operands = 0 : i64, tpu.core_type = #tpu.core_type<tc>, window_params = [{transform_indices = @transform_0, window_bounds = array<i64: 8, 31>}, {transform_indices = @transform_1, window_bounds = array<i64: 8, 1>}, {pipeline_mode = #tpu.pipeline_mode<synchronous>, transform_indices = @transform_2, window_bounds = array<i64: 31, 128>}, {pipeline_mode = #tpu.pipeline_mode<synchronous>, transform_indices = @transform_3, window_bounds = array<i64: 1, 128>}, {pipeline_mode = #tpu.pipeline_mode<synchronous>, transform_indices = @transform_4, window_bounds = array<i64: 1, 128>}, {pipeline_mode = #tpu.pipeline_mode<synchronous>, transform_indices = @transform_5, window_bounds = array<i64: 128, 128>}, {pipeline_mode = #tpu.pipeline_mode<synchronous>, transform_indices = @transform_6, window_bounds = array<i64: 1, 128>}, {pipeline_mode = #tpu.pipeline_mode<synchronous>, transform_indices = @transform_7, window_bounds = array<i64: 128, 128>}, {pipeline_mode = #tpu.pipeline_mode<synchronous>, transform_indices = @transform_8, window_bounds = array<i64: 1, 128>}, {pipeline_mode = #tpu.pipeline_mode<synchronous>, transform_indices = @transform_9, window_bounds = array<i64: 128, 128>}, {pipeline_mode = #tpu.pipeline_mode<synchronous>, transform_indices = @transform_10, window_bounds = array<i64: 1, 128>}, {pipeline_mode = #tpu.pipeline_mode<synchronous>, transform_indices = @transform_11, window_bounds = array<i64: 1, 128>}, {transform_indices = @transform_12, window_bounds = array<i64: 1, 1>}, {transform_indices = @transform_13, window_bounds = array<i64: 8, 1>}]} {
    %c0 = arith.constant 0 : index
    %c0_0 = arith.constant 0 : index
    %0 = vector.load %arg1[%c0, %c0_0] : memref<8x31xbf16, #tpu.memory_space<vmem>>, vector<8x31xbf16>
    %c0_1 = arith.constant 0 : index
    %c0_2 = arith.constant 0 : index
    %1 = vector.load %arg2[%c0_1, %c0_2] : memref<8x1xf32, #tpu.memory_space<vmem>>, vector<8x1xf32>
    %c0_3 = arith.constant 0 : index
    %c0_4 = arith.constant 0 : index
    %2 = vector.load %arg3[%c0_3, %c0_4] : memref<31x128xbf16, #tpu.memory_space<vmem>>, vector<31x128xbf16>
    %cst = arith.constant dense<0.000000e+00> : vector<8x128xf32>
    %3 = tpu.matmul %0, %2, %cst {dimension_numbers = #tpu.dot_dimension_numbers<[1], [0], [0], [1], [0, 0, 1, 1], [], []>} : vector<8x31xbf16>, vector<31x128xbf16>, vector<8x128xf32> -> vector<8x128xf32>
    %c0_5 = arith.constant 0 : index
    %c0_6 = arith.constant 0 : index
    %4 = vector.load %arg4[%c0_5, %c0_6] : memref<1x128xf32, #tpu.memory_space<vmem>>, vector<1x128xf32>
    %5 = vector.broadcast %1 : vector<8x1xf32> to vector<8x128xf32>
    %6 = vector.broadcast %4 : vector<1x128xf32> to vector<8x128xf32>
    %7 = arith.mulf %5, %6 : vector<8x128xf32>
    %8 = arith.addf %3, %7 : vector<8x128xf32>
    %9 = arith.truncf %8 : vector<8x128xf32> to vector<8x128xbf16>
    %c0_7 = arith.constant 0 : index
    %c0_8 = arith.constant 0 : index
    %10 = vector.load %arg5[%c0_7, %c0_8] : memref<1x128xbf16, #tpu.memory_space<vmem>>, vector<1x128xbf16>
    %11 = vector.broadcast %10 : vector<1x128xbf16> to vector<8x128xbf16>
    %12 = arith.addf %9, %11 : vector<8x128xbf16>
    %cst_9 = arith.constant 2.001950e-01 : bf16
    %13 = vector.broadcast %cst_9 : bf16 to vector<8x128xbf16>
    %14 = arith.mulf %13, %12 : vector<8x128xbf16>
    %15 = arith.maximumf %12, %14 : vector<8x128xbf16>
    %c0_10 = arith.constant 0 : index
    %c0_11 = arith.constant 0 : index
    %16 = vector.load %arg6[%c0_10, %c0_11] : memref<128x128xbf16, #tpu.memory_space<vmem>>, vector<128x128xbf16>
    %cst_12 = arith.constant dense<0.000000e+00> : vector<8x128xf32>
    %17 = tpu.matmul %15, %16, %cst_12 {dimension_numbers = #tpu.dot_dimension_numbers<[1], [0], [0], [1], [0, 0, 1, 1], [], []>} : vector<8x128xbf16>, vector<128x128xbf16>, vector<8x128xf32> -> vector<8x128xf32>
    %18 = arith.truncf %17 : vector<8x128xf32> to vector<8x128xbf16>
    %c0_13 = arith.constant 0 : index
    %c0_14 = arith.constant 0 : index
    %19 = vector.load %arg7[%c0_13, %c0_14] : memref<1x128xbf16, #tpu.memory_space<vmem>>, vector<1x128xbf16>
    %20 = vector.broadcast %19 : vector<1x128xbf16> to vector<8x128xbf16>
    %21 = arith.addf %18, %20 : vector<8x128xbf16>
    %cst_15 = arith.constant 2.001950e-01 : bf16
    %22 = vector.broadcast %cst_15 : bf16 to vector<8x128xbf16>
    %23 = arith.mulf %22, %21 : vector<8x128xbf16>
    %24 = arith.maximumf %21, %23 : vector<8x128xbf16>
    %c0_16 = arith.constant 0 : index
    %c0_17 = arith.constant 0 : index
    %25 = vector.load %arg8[%c0_16, %c0_17] : memref<128x128xbf16, #tpu.memory_space<vmem>>, vector<128x128xbf16>
    %cst_18 = arith.constant dense<0.000000e+00> : vector<8x128xf32>
    %26 = tpu.matmul %24, %25, %cst_18 {dimension_numbers = #tpu.dot_dimension_numbers<[1], [0], [0], [1], [0, 0, 1, 1], [], []>} : vector<8x128xbf16>, vector<128x128xbf16>, vector<8x128xf32> -> vector<8x128xf32>
    %27 = arith.truncf %26 : vector<8x128xf32> to vector<8x128xbf16>
    %c0_19 = arith.constant 0 : index
    %c0_20 = arith.constant 0 : index
    %28 = vector.load %arg9[%c0_19, %c0_20] : memref<1x128xbf16, #tpu.memory_space<vmem>>, vector<1x128xbf16>
    %29 = vector.broadcast %28 : vector<1x128xbf16> to vector<8x128xbf16>
    %30 = arith.addf %27, %29 : vector<8x128xbf16>
    %cst_21 = arith.constant 2.001950e-01 : bf16
    %31 = vector.broadcast %cst_21 : bf16 to vector<8x128xbf16>
    %32 = arith.mulf %31, %30 : vector<8x128xbf16>
    %33 = arith.maximumf %30, %32 : vector<8x128xbf16>
    %c0_22 = arith.constant 0 : index
    %c0_23 = arith.constant 0 : index
    %34 = vector.load %arg10[%c0_22, %c0_23] : memref<128x128xbf16, #tpu.memory_space<vmem>>, vector<128x128xbf16>
    %cst_24 = arith.constant dense<0.000000e+00> : vector<8x128xf32>
    %35 = tpu.matmul %33, %34, %cst_24 {dimension_numbers = #tpu.dot_dimension_numbers<[1], [0], [0], [1], [0, 0, 1, 1], [], []>} : vector<8x128xbf16>, vector<128x128xbf16>, vector<8x128xf32> -> vector<8x128xf32>
    %36 = arith.truncf %35 : vector<8x128xf32> to vector<8x128xbf16>
    %c0_25 = arith.constant 0 : index
    %c0_26 = arith.constant 0 : index
    %37 = vector.load %arg11[%c0_25, %c0_26] : memref<1x128xbf16, #tpu.memory_space<vmem>>, vector<1x128xbf16>
    %38 = vector.broadcast %37 : vector<1x128xbf16> to vector<8x128xbf16>
    %39 = arith.addf %36, %38 : vector<8x128xbf16>
    %cst_27 = arith.constant 2.001950e-01 : bf16
    %40 = vector.broadcast %cst_27 : bf16 to vector<8x128xbf16>
    %41 = arith.mulf %40, %39 : vector<8x128xbf16>
    %42 = arith.maximumf %39, %41 : vector<8x128xbf16>
    %43 = arith.extf %42 : vector<8x128xbf16> to vector<8x128xf32>
    %c0_28 = arith.constant 0 : index
    %c0_29 = arith.constant 0 : index
    %44 = vector.load %arg12[%c0_28, %c0_29] : memref<1x128xf32, #tpu.memory_space<vmem>>, vector<1x128xf32>
    %45 = vector.broadcast %44 : vector<1x128xf32> to vector<8x128xf32>
    %46 = arith.mulf %43, %45 : vector<8x128xf32>
    %cst_30 = arith.constant dense<0.000000e+00> : vector<8xf32>
    %47 = vector.multi_reduction <add>, %46, %cst_30 [1] : vector<8x128xf32> to vector<8xf32>
    %48 = vector.shape_cast %47 : vector<8xf32> to vector<8x1xf32>
    %c0_31 = arith.constant 0 : index
    %c0_32 = arith.constant 0 : index
    %49 = memref.load %arg13[%c0_31, %c0_32] : memref<1x1xf32, #tpu.memory_space<smem>>
    %50 = vector.broadcast %49 : f32 to vector<8x1xf32>
    %51 = arith.addf %48, %50 : vector<8x1xf32>
    %cst_33 = arith.constant 0.000000e+00 : f32
    %52 = vector.broadcast %cst_33 : f32 to vector<8x1xf32>
    %53 = arith.subf %52, %51 : vector<8x1xf32>
    %54 = math.exp %53 : vector<8x1xf32>
    %cst_34 = arith.constant 1.000000e+00 : f32
    %55 = vector.broadcast %cst_34 : f32 to vector<8x1xf32>
    %56 = arith.addf %55, %54 : vector<8x1xf32>
    %cst_35 = arith.constant 1.000000e+00 : f32
    %57 = vector.broadcast %cst_35 : f32 to vector<8x1xf32>
    %58 = arith.divf %57, %56 : vector<8x1xf32>
    %c0_36 = arith.constant 0 : index
    %c0_37 = arith.constant 0 : index
    %59 = vector.load %arg14[%c0_36, %c0_37] : memref<8x1xf32, #tpu.memory_space<vmem>>, vector<8x1xf32>
    tpu.vector_store %arg14[%c0_36, %c0_37], %58 {strides = array<i32>} : memref<8x1xf32, #tpu.memory_space<vmem>>, vector<8x1xf32>,
    return
  }
  func.func @transform_0(%arg0: i32) -> (i32, i32) {
    %c0_i32 = arith.constant 0 : i32
    %c0_i32_0 = arith.constant 0 : i32
    return %arg0, %c0_i32 : i32, i32
  }
  func.func @transform_1(%arg0: i32) -> (i32, i32) {
    %c0_i32 = arith.constant 0 : i32
    %c0_i32_0 = arith.constant 0 : i32
    return %arg0, %c0_i32 : i32, i32
  }
  func.func @transform_2(%arg0: i32) -> (i32, i32) {
    %c0_i32 = arith.constant 0 : i32
    %c0_i32_0 = arith.constant 0 : i32
    %c0_i32_1 = arith.constant 0 : i32
    return %c0_i32, %c0_i32_0 : i32, i32
  }
  func.func @transform_3(%arg0: i32) -> (i32, i32) {
    %c0_i32 = arith.constant 0 : i32
    %c0_i32_0 = arith.constant 0 : i32
    %c0_i32_1 = arith.constant 0 : i32
    return %c0_i32, %c0_i32_0 : i32, i32
  }
  func.func @transform_4(%arg0: i32) -> (i32, i32) {
    %c0_i32 = arith.constant 0 : i32
    %c0_i32_0 = arith.constant 0 : i32
    %c0_i32_1 = arith.constant 0 : i32
    return %c0_i32, %c0_i32_0 : i32, i32
  }
  func.func @transform_5(%arg0: i32) -> (i32, i32) {
    %c0_i32 = arith.constant 0 : i32
    %c0_i32_0 = arith.constant 0 : i32
    %c0_i32_1 = arith.constant 0 : i32
    return %c0_i32, %c0_i32_0 : i32, i32
  }
  func.func @transform_6(%arg0: i32) -> (i32, i32) {
    %c0_i32 = arith.constant 0 : i32
    %c0_i32_0 = arith.constant 0 : i32
    %c0_i32_1 = arith.constant 0 : i32
    return %c0_i32, %c0_i32_0 : i32, i32
  }
  func.func @transform_7(%arg0: i32) -> (i32, i32) {
    %c0_i32 = arith.constant 0 : i32
    %c0_i32_0 = arith.constant 0 : i32
    %c0_i32_1 = arith.constant 0 : i32
    return %c0_i32, %c0_i32_0 : i32, i32
  }
  func.func @transform_8(%arg0: i32) -> (i32, i32) {
    %c0_i32 = arith.constant 0 : i32
    %c0_i32_0 = arith.constant 0 : i32
    %c0_i32_1 = arith.constant 0 : i32
    return %c0_i32, %c0_i32_0 : i32, i32
  }
  func.func @transform_9(%arg0: i32) -> (i32, i32) {
    %c0_i32 = arith.constant 0 : i32
    %c0_i32_0 = arith.constant 0 : i32
    %c0_i32_1 = arith.constant 0 : i32
    return %c0_i32, %c0_i32_0 : i32, i32
  }
  func.func @transform_10(%arg0: i32) -> (i32, i32) {
    %c0_i32 = arith.constant 0 : i32
    %c0_i32_0 = arith.constant 0 : i32
    %c0_i32_1 = arith.constant 0 : i32
    return %c0_i32, %c0_i32_0 : i32, i32
  }
  func.func @transform_11(%arg0: i32) -> (i32, i32) {
    %c0_i32 = arith.constant 0 : i32
    %c0_i32_0 = arith.constant 0 : i32
    %c0_i32_1 = arith.constant 0 : i32
    return %c0_i32, %c0_i32_0 : i32, i32
  }
  func.func @transform_12(%arg0: i32) -> (i32, i32) {
    %c0_i32 = arith.constant 0 : i32
    %c0_i32_0 = arith.constant 0 : i32
    %c0_i32_1 = arith.constant 0 : i32
    return %c0_i32, %c0_i32_0 : i32, i32
  }
  func.func @transform_13(%arg0: i32) -> (i32, i32) {
    %c0_i32 = arith.constant 0 : i32
    %c0_i32_0 = arith.constant 0 : i32
    return %arg0, %c0_i32 : i32, i32
  }
}

</mosaic_0001>

<llo_original>
// kernel: tpu_custom_call.1
$region0: #{tpu_custom_call.1}
  #allocation0 [shape = 'u32[]', space=smem, size = 0x4, offset = 0x4, fixed_abs, tag = 'smem constant byte address 0x4 - core index']
  #allocation1 [shape = 'u32[144,128]{1,0:T(1,128)}', space=vmem, size = 0x12000, scoped, tag = 'internal scratch']
  #allocation2 [shape = 'f32[1,1]{1,0:T(1,128)S(6)}', space=smem, size = 0x200, scoped, tag = 'scoped memory for tpu_custom_call.1']
  %s0 = inlined_call_operand.vmem [shape: bf16[8,31], index: 0, kind: input, shape index: {}]
  %s1 = inlined_call_operand.vmem [shape: f32[8,1], index: 1, kind: input, shape index: {}]
  %s2 = inlined_call_operand.vmem [shape: bf16[31,128], index: 2, kind: input, shape index: {}]
  %s3 = inlined_call_operand.vmem [shape: f32[1,128], index: 3, kind: input, shape index: {}]
  %s4 = inlined_call_operand.vmem [shape: bf16[1,128], index: 4, kind: input, shape index: {}]
  %s5 = inlined_call_operand.hbm [shape: bf16[128,128], index: 5, kind: input, shape index: {}]
  %s6 = inlined_call_operand.vmem [shape: bf16[1,128], index: 6, kind: input, shape index: {}]
  %s7 = inlined_call_operand.hbm [shape: bf16[128,128], index: 7, kind: input, shape index: {}]
  %s8 = inlined_call_operand.vmem [shape: bf16[1,128], index: 8, kind: input, shape index: {}]
  %s9 = inlined_call_operand.hbm [shape: bf16[128,128], index: 9, kind: input, shape index: {}]
  %s10 = inlined_call_operand.vmem [shape: bf16[1,128], index: 10, kind: input, shape index: {}]
  %s11 = inlined_call_operand.vmem [shape: f32[1,128], index: 11, kind: input, shape index: {}]
  %s12 = inlined_call_operand.<no memory space> [shape: f32[1,1], index: 12, kind: input, shape index: {}]
  %s13 = inlined_call_operand.vmem [shape: f32[8,1], index: 13, kind: output, shape index: {}]
  %s14 = sld [smem:[#allocation0]]
  $region74: #{tpu_custom_call.1} parent=0
    _
  %s16 = ssub.s32 1, %s14
  %s17 = scalar_select 0, %s16, %s14
  %18 = sst [smem:[#allocation2]] %s12
  $region1: #{tpu_custom_call.1} parent=0
    #allocation3 [shape = 'u8[32768]{0}', space=vmem, size = 0x8000, scoped, tag = 'input window, operand 5, single buffered']
    #allocation4 [shape = 's32[1]{0}', space=sflag, size = 0x4, scoped, tag = 'scoped memory for tpu_custom_call.1']
    #allocation5 [shape = 'u8[32768]{0}', space=vmem, size = 0x8000, scoped, tag = 'input window, operand 7, single buffered']
    #allocation6 [shape = 's32[1]{0}', space=sflag, size = 0x4, scoped, tag = 'scoped memory for tpu_custom_call.1']
    #allocation7 [shape = 'u8[32768]{0}', space=vmem, size = 0x8000, scoped, tag = 'input window, operand 9, single buffered']
    %19 = vsyncpa [#allocation4], 0
    %20 = vsyncpa [#allocation6], 0
    // Predicated region
    $region2: #{tpu_custom_call.1} parent=1 // pred_check
      _
    $region3: #{tpu_custom_call.1} parent=1 // pred_check_branch
      %22 = sbr.rel (0) target = $region5
    $region4: #{tpu_custom_call.1} parent=1 // pred_region
      _
    $region5: #{tpu_custom_call.1} parent=1 // pred_fallthru
      _
    // Predicated region
    $region6: #{tpu_custom_call.1} parent=1 // pred_check
      _
    $region7: #{tpu_custom_call.1} parent=1 // pred_check_branch
      %24 = sbr.rel (0) target = $region9
    $region8: #{tpu_custom_call.1} parent=1 // pred_region
      _
    $region9: #{tpu_custom_call.1} parent=1 // pred_fallthru
      _
    // Predicated region
    $region10: #{tpu_custom_call.1} parent=1 // pred_check
      _
    $region11: #{tpu_custom_call.1} parent=1 // pred_check_branch
      %26 = sbr.rel (0) target = $region13
    $region12: #{tpu_custom_call.1} parent=1 // pred_region
      _
    $region13: #{tpu_custom_call.1} parent=1 // pred_fallthru
      _
    // Predicated region
    $region14: #{tpu_custom_call.1} parent=1 // pred_check
      _
    $region15: #{tpu_custom_call.1} parent=1 // pred_check_branch
      %28 = sbr.rel (0) target = $region17
    $region16: #{tpu_custom_call.1} parent=1 // pred_region
      _
    $region17: #{tpu_custom_call.1} parent=1 // pred_fallthru
      _
    // Predicated region
    $region18: #{tpu_custom_call.1} parent=1 // pred_check
      _
    $region19: #{tpu_custom_call.1} parent=1 // pred_check_branch
      %30 = sbr.rel (0) target = $region21
    $region20: #{tpu_custom_call.1} parent=1 // pred_region
      _
    $region21: #{tpu_custom_call.1} parent=1 // pred_fallthru
      _
    // Predicated region
    $region22: #{tpu_custom_call.1} parent=1 // pred_check
      _
    $region23: #{tpu_custom_call.1} parent=1 // pred_check_branch
      %32 = sbr.rel (0) target = $region25
    $region24: #{tpu_custom_call.1} parent=1 // pred_region
      %s34 = ssub.s32 1024, 1024
      %35 = vsyncadd [#allocation4], %s34
      %s36 = sshll.u32 [#allocation3], 4
      %s37 = int_to_ptr.vmem [resolvable:$true] %s36
      %42 = dma.hbm_to_vmem [thread:$0]  %s5, 1024, %s37, [#allocation4], 64, 64, 4
    $region25: #{tpu_custom_call.1} parent=1 // pred_fallthru
      _
    // Predicated region
    $region26: #{tpu_custom_call.1} parent=1 // pred_check
      _
    $region27: #{tpu_custom_call.1} parent=1 // pred_check_branch
      %44 = sbr.rel (0) target = $region29
    $region28: #{tpu_custom_call.1} parent=1 // pred_region
      _
    $region29: #{tpu_custom_call.1} parent=1 // pred_fallthru
      _
    // Predicated region
    $region30: #{tpu_custom_call.1} parent=1 // pred_check
      _
    $region31: #{tpu_custom_call.1} parent=1 // pred_check_branch
      %46 = sbr.rel (0) target = $region33
    $region32: #{tpu_custom_call.1} parent=1 // pred_region
      %s48 = ssub.s32 1024, 1024
      %49 = vsyncadd [#allocation6], %s48
      %s50 = sshll.u32 [#allocation5], 4
      %s51 = int_to_ptr.vmem [resolvable:$true] %s50
      %56 = dma.hbm_to_vmem [thread:$0]  %s7, 1024, %s51, [#allocation6], 64, 64, 4
    $region33: #{tpu_custom_call.1} parent=1 // pred_fallthru
      _
    // Predicated region
    $region34: #{tpu_custom_call.1} parent=1 // pred_check
      _
    $region35: #{tpu_custom_call.1} parent=1 // pred_check_branch
      %58 = sbr.rel (0) target = $region37
    $region36: #{tpu_custom_call.1} parent=1 // pred_region
      _
    $region37: #{tpu_custom_call.1} parent=1 // pred_fallthru
      _
    // Predicated region
    $region38: #{tpu_custom_call.1} parent=1 // pred_check
      _
    $region39: #{tpu_custom_call.1} parent=1 // pred_check_branch
      %60 = sbr.rel (0) target = $region41
    $region40: #{tpu_custom_call.1} parent=1 // pred_region
      %s62 = ssub.s32 1024, 1024
      %63 = vsyncadd [#allocation6], %s62
      %s64 = sshll.u32 [#allocation7], 4
      %s65 = int_to_ptr.vmem [resolvable:$true] %s64
      %70 = dma.hbm_to_vmem [thread:$0]  %s9, 1024, %s65, [#allocation6], 64, 64, 4
    $region41: #{tpu_custom_call.1} parent=1 // pred_fallthru
      _
    // Predicated region
    $region42: #{tpu_custom_call.1} parent=1 // pred_check
      _
    $region43: #{tpu_custom_call.1} parent=1 // pred_check_branch
      %72 = sbr.rel (0) target = $region45
    $region44: #{tpu_custom_call.1} parent=1 // pred_region
      _
    $region45: #{tpu_custom_call.1} parent=1 // pred_fallthru
      _
    // Predicated region
    $region46: #{tpu_custom_call.1} parent=1 // pred_check
      _
    $region47: #{tpu_custom_call.1} parent=1 // pred_check_branch
      %74 = sbr.rel (0) target = $region49
    $region48: #{tpu_custom_call.1} parent=1 // pred_region
      _
    $region49: #{tpu_custom_call.1} parent=1 // pred_fallthru
      _
    // Predicated region
    $region50: #{tpu_custom_call.1} parent=1 // pred_check
      _
    $region51: #{tpu_custom_call.1} parent=1 // pred_check_branch
      %76 = sbr.rel (0) target = $region53
    $region52: #{tpu_custom_call.1} parent=1 // pred_region
      _
    $region53: #{tpu_custom_call.1} parent=1 // pred_fallthru
      _
    // Predicated region
    $region54: #{tpu_custom_call.1} parent=1 // pred_check
      _
    $region55: #{tpu_custom_call.1} parent=1 // pred_check_branch
      %78 = sbr.rel (0) target = $region57
    $region56: #{tpu_custom_call.1} parent=1 // pred_region
      %79 = dma.done [#allocation4], 1024
    $region57: #{tpu_custom_call.1} parent=1 // pred_fallthru
      _
    // Predicated region
    $region58: #{tpu_custom_call.1} parent=1 // pred_check
      _
    $region59: #{tpu_custom_call.1} parent=1 // pred_check_branch
      %81 = sbr.rel (0) target = $region61
    $region60: #{tpu_custom_call.1} parent=1 // pred_region
      %82 = dma.done [#allocation6], 1024
    $region61: #{tpu_custom_call.1} parent=1 // pred_fallthru
      _
    // Predicated region
    $region62: #{tpu_custom_call.1} parent=1 // pred_check
      _
    $region63: #{tpu_custom_call.1} parent=1 // pred_check_branch
      %84 = sbr.rel (0) target = $region65
    $region64: #{tpu_custom_call.1} parent=1 // pred_region
      %85 = dma.done [#allocation6], 1024
    $region65: #{tpu_custom_call.1} parent=1 // pred_fallthru
      _
    %v88 = vld [vmem:[%s0] sm:$0xf]
    %v89 = vld [vmem:[%s1] sm:$0xff]
    %v90 = vld [vmem:[%s2] sm:$0xf]
    %v91 = vld [vmem:[%s2 + $0x4] sm:$0xf]
    %v92 = vld [vmem:[%s2 + $0x8] sm:$0xf]
    %v93 = vld [vmem:[%s2 + $0xc] sm:$0xf]
    %v94 = vld [vmem:[%s3] sm:$0x1]
    %96 = vset.pattern.permute.xlu0 0
    %97 = vperm.xlu0 %96, %v89
    %v98 = vpop.permute.xlu0 %97
    %v101 = vlaneseq
    %v102 = vshrl.u32 %v101, 7
    %v103 = vsub.s32 0, %v102
    %v104 = vrot.slane %v94, %v103
    %v106 = vmul.f32 %v98, %v104
    %v111 = vunpack.c.l.b16 %v90
    %v112 = vunpack.c.l.b16 %v91
    %v113 = vunpack.c.l.b16 %v92
    %v114 = vunpack.c.l.b16 %v93
    %v115 = vpack.c.b16 %v112, %v111
    %v116 = vpack.c.b16 %v114, %v113
    %vm118 = vcmask 252928
    %v120 = vsel %vm118, %v88, 0
    %vm122 = vcmask 1046528
    %vm123 = vcmask 1047552
    %v124 = vsel %vm122, 4294967295, 65535
    %v125 = vsel %vm123, %v124, 0
    %v127 = vand.u32 %v116, %v125
    %129 = vmatprep.subr.bf16.mxu0 0
    %130 = vmatpush1.bf16.msra.mxu0 %v115
    %131 = vmatprep.subr.bf16.mxu0 0
    %132 = vmatpush1.bf16.msra.mxu0 %v127
    %133 = vmatprep.subr.bf16.mxu0 0
    %134 = vmatpush1.bf16.msra.mxu0 0
    %135 = vmatprep.subr.bf16.mxu0 0
    %136 = vmatpush1.bf16.msra.mxu0 0
    %137 = vmatprep.subr.bf16.mxu0 0
    %138 = vmatpush1.bf16.msra.mxu0 0
    %139 = vmatprep.subr.bf16.mxu0 0
    %140 = vmatpush1.bf16.msra.mxu0 0
    %141 = vmatprep.subr.bf16.mxu0 0
    %142 = vmatpush1.bf16.msra.mxu0 0
    %143 = vmatprep.subr.bf16.mxu0 0
    %144 = vmatpush1.bf16.msra.mxu0 0
    %145 = vmatprep.subr.bf16.mxu0 0
    %146 = vmatpush1.bf16.msra.mxu0 0
    %147 = vmatprep.subr.bf16.mxu0 0
    %148 = vmatpush1.bf16.msra.mxu0 0
    %149 = vmatprep.subr.bf16.mxu0 0
    %150 = vmatpush1.bf16.msra.mxu0 0
    %151 = vmatprep.subr.bf16.mxu0 0
    %152 = vmatpush1.bf16.msra.mxu0 0
    %153 = vmatprep.subr.bf16.mxu0 0
    %154 = vmatpush1.bf16.msra.mxu0 0
    %155 = vmatprep.subr.bf16.mxu0 0
    %156 = vmatpush1.bf16.msra.mxu0 0
    %157 = vmatprep.subr.bf16.mxu0 0
    %158 = vmatpush1.bf16.msra.mxu0 0
    %159 = vmatprep.subr.bf16.mxu0 0
    %160 = vmatpush1.bf16.msra.mxu0 0
    %161 = vmatprep.mubr.bf16.mxu0 0
    %162 = vmatmul.mubr.bf16.gmra.mrb[0].mxu0 %v120
    %v163 = vpop.f32.mrb[0].mxu0
    %v164 = vadd.f32 %v106, %v163
    %v165 = vpop.f32.mrb[0].mxu0
    %v166 = vpop.f32.mrb[0].mxu0
    %v167 = vpop.f32.mrb[0].mxu0
    %168 = vdwg.mxu0
    %v169 = vpack.c.bf16 %v164, %v164
    %v170 = vld [vmem:[%s4] sm:$0x1]
    %v172 = vpack.i.b16 %v170, %v170
    %v174 = vlaneseq
    %v175 = vshrl.u32 %v174, 7
    %v176 = vsub.s32 0, %v175
    %v177 = vrot.slane %v172, %v176
    %v178 = vadd.bf16 %v169, %v177
    %v179 = vmul.bf16 %v178, 1045249613
    %v180 = vmax.bf16 %v178, %v179
    %v181 = vld [vmem:[#allocation3] sm:$0xf]
    %v182 = vld [vmem:[#allocation3 + $0x4] sm:$0xf]
    %v183 = vld [vmem:[#allocation3 + $0x8] sm:$0xf]
    %v184 = vld [vmem:[#allocation3 + $0xc] sm:$0xf]
    %v185 = vld [vmem:[#allocation3 + $0x10] sm:$0xf]
    %v186 = vld [vmem:[#allocation3 + $0x14] sm:$0xf]
    %v187 = vld [vmem:[#allocation3 + $0x18] sm:$0xf]
    %v188 = vld [vmem:[#allocation3 + $0x1c] sm:$0xf]
    %v189 = vld [vmem:[#allocation3 + $0x20] sm:$0xf]
    %v190 = vld [vmem:[#allocation3 + $0x24] sm:$0xf]
    %v191 = vld [vmem:[#allocation3 + $0x28] sm:$0xf]
    %v192 = vld [vmem:[#allocation3 + $0x2c] sm:$0xf]
    %v193 = vld [vmem:[#allocation3 + $0x30] sm:$0xf]
    %v194 = vld [vmem:[#allocation3 + $0x34] sm:$0xf]
    %v195 = vld [vmem:[#allocation3 + $0x38] sm:$0xf]
    %v196 = vld [vmem:[#allocation3 + $0x3c] sm:$0xf]
    %v213 = vunpack.c.l.b16 %v181
    %v214 = vunpack.c.l.b16 %v182
    %v215 = vunpack.c.l.b16 %v183
    %v216 = vunpack.c.l.b16 %v184
    %v217 = vunpack.c.l.b16 %v185
    %v218 = vunpack.c.l.b16 %v186
    %v219 = vunpack.c.l.b16 %v187
    %v220 = vunpack.c.l.b16 %v188
    %v221 = vunpack.c.l.b16 %v189
    %v222 = vunpack.c.l.b16 %v190
    %v223 = vunpack.c.l.b16 %v191
    %v224 = vunpack.c.l.b16 %v192
    %v225 = vunpack.c.l.b16 %v193
    %v226 = vunpack.c.l.b16 %v194
    %v227 = vunpack.c.l.b16 %v195
    %v228 = vunpack.c.l.b16 %v196
    %v229 = vpack.c.b16 %v214, %v213
    %v230 = vpack.c.b16 %v216, %v215
    %v231 = vpack.c.b16 %v218, %v217
    %v232 = vpack.c.b16 %v220, %v219
    %v233 = vpack.c.b16 %v222, %v221
    %v234 = vpack.c.b16 %v224, %v223
    %v235 = vpack.c.b16 %v226, %v225
    %v236 = vpack.c.b16 %v228, %v227
    %245 = vmatprep.subr.bf16.mxu0 0
    %246 = vmatpush1.bf16.msra.mxu0 %v229
    %247 = vmatprep.subr.bf16.mxu0 0
    %248 = vmatpush1.bf16.msra.mxu0 %v230
    %249 = vmatprep.subr.bf16.mxu0 0
    %250 = vmatpush1.bf16.msra.mxu0 %v231
    %251 = vmatprep.subr.bf16.mxu0 0
    %252 = vmatpush1.bf16.msra.mxu0 %v232
    %253 = vmatprep.subr.bf16.mxu0 0
    %254 = vmatpush1.bf16.msra.mxu0 %v233
    %255 = vmatprep.subr.bf16.mxu0 0
    %256 = vmatpush1.bf16.msra.mxu0 %v234
    %257 = vmatprep.subr.bf16.mxu0 0
    %258 = vmatpush1.bf16.msra.mxu0 %v235
    %259 = vmatprep.subr.bf16.mxu0 0
    %260 = vmatpush1.bf16.msra.mxu0 %v236
    %261 = vmatprep.subr.bf16.mxu0 0
    %262 = vmatpush1.bf16.msra.mxu0 0
    %263 = vmatprep.subr.bf16.mxu0 0
    %264 = vmatpush1.bf16.msra.mxu0 0
    %265 = vmatprep.subr.bf16.mxu0 0
    %266 = vmatpush1.bf16.msra.mxu0 0
    %267 = vmatprep.subr.bf16.mxu0 0
    %268 = vmatpush1.bf16.msra.mxu0 0
    %269 = vmatprep.subr.bf16.mxu0 0
    %270 = vmatpush1.bf16.msra.mxu0 0
    %271 = vmatprep.subr.bf16.mxu0 0
    %272 = vmatpush1.bf16.msra.mxu0 0
    %273 = vmatprep.subr.bf16.mxu0 0
    %274 = vmatpush1.bf16.msra.mxu0 0
    %275 = vmatprep.subr.bf16.mxu0 0
    %276 = vmatpush1.bf16.msra.mxu0 0
    %277 = vmatprep.mubr.bf16.mxu0 0
    %278 = vmatmul.mubr.bf16.gmra.mrb[0].mxu0 %v180
    %v279 = vpop.f32.mrb[0].mxu0
    %v280 = vadd.f32 0.0, %v279
    %v281 = vpop.f32.mrb[0].mxu0
    %v282 = vpop.f32.mrb[0].mxu0
    %v283 = vpop.f32.mrb[0].mxu0
    %284 = vdwg.mxu0
    %v285 = vpack.c.bf16 %v280, %v280
    %v286 = vld [vmem:[%s6] sm:$0x1]
    %v288 = vpack.i.b16 %v286, %v286
    %v290 = vlaneseq
    %v291 = vshrl.u32 %v290, 7
    %v292 = vsub.s32 0, %v291
    %v293 = vrot.slane %v288, %v292
    %v294 = vadd.bf16 %v285, %v293
    %v295 = vmul.bf16 %v294, 1045249613
    %v296 = vmax.bf16 %v294, %v295
    %v297 = vld [vmem:[#allocation5] sm:$0xf]
    %v298 = vld [vmem:[#allocation5 + $0x4] sm:$0xf]
    %v299 = vld [vmem:[#allocation5 + $0x8] sm:$0xf]
    %v300 = vld [vmem:[#allocation5 + $0xc] sm:$0xf]
    %v301 = vld [vmem:[#allocation5 + $0x10] sm:$0xf]
    %v302 = vld [vmem:[#allocation5 + $0x14] sm:$0xf]
    %v303 = vld [vmem:[#allocation5 + $0x18] sm:$0xf]
    %v304 = vld [vmem:[#allocation5 + $0x1c] sm:$0xf]
    %v305 = vld [vmem:[#allocation5 + $0x20] sm:$0xf]
    %v306 = vld [vmem:[#allocation5 + $0x24] sm:$0xf]
    %v307 = vld [vmem:[#allocation5 + $0x28] sm:$0xf]
    %v308 = vld [vmem:[#allocation5 + $0x2c] sm:$0xf]
    %v309 = vld [vmem:[#allocation5 + $0x30] sm:$0xf]
    %v310 = vld [vmem:[#allocation5 + $0x34] sm:$0xf]
    %v311 = vld [vmem:[#allocation5 + $0x38] sm:$0xf]
    %v312 = vld [vmem:[#allocation5 + $0x3c] sm:$0xf]
    %v329 = vunpack.c.l.b16 %v297
    %v330 = vunpack.c.l.b16 %v298
    %v331 = vunpack.c.l.b16 %v299
    %v332 = vunpack.c.l.b16 %v300
    %v333 = vunpack.c.l.b16 %v301
    %v334 = vunpack.c.l.b16 %v302
    %v335 = vunpack.c.l.b16 %v303
    %v336 = vunpack.c.l.b16 %v304
    %v337 = vunpack.c.l.b16 %v305
    %v338 = vunpack.c.l.b16 %v306
    %v339 = vunpack.c.l.b16 %v307
    %v340 = vunpack.c.l.b16 %v308
    %v341 = vunpack.c.l.b16 %v309
    %v342 = vunpack.c.l.b16 %v310
    %v343 = vunpack.c.l.b16 %v311
    %v344 = vunpack.c.l.b16 %v312
    %v345 = vpack.c.b16 %v330, %v329
    %v346 = vpack.c.b16 %v332, %v331
    %v347 = vpack.c.b16 %v334, %v333
    %v348 = vpack.c.b16 %v336, %v335
    %v349 = vpack.c.b16 %v338, %v337
    %v350 = vpack.c.b16 %v340, %v339
    %v351 = vpack.c.b16 %v342, %v341
    %v352 = vpack.c.b16 %v344, %v343
    %361 = vmatprep.subr.bf16.mxu0 0
    %362 = vmatpush1.bf16.msra.mxu0 %v345
    %363 = vmatprep.subr.bf16.mxu0 0
    %364 = vmatpush1.bf16.msra.mxu0 %v346
    %365 = vmatprep.subr.bf16.mxu0 0
    %366 = vmatpush1.bf16.msra.mxu0 %v347
    %367 = vmatprep.subr.bf16.mxu0 0
    %368 = vmatpush1.bf16.msra.mxu0 %v348
    %369 = vmatprep.subr.bf16.mxu0 0
    %370 = vmatpush1.bf16.msra.mxu0 %v349
    %371 = vmatprep.subr.bf16.mxu0 0
    %372 = vmatpush1.bf16.msra.mxu0 %v350
    %373 = vmatprep.subr.bf16.mxu0 0
    %374 = vmatpush1.bf16.msra.mxu0 %v351
    %375 = vmatprep.subr.bf16.mxu0 0
    %376 = vmatpush1.bf16.msra.mxu0 %v352
    %377 = vmatprep.subr.bf16.mxu0 0
    %378 = vmatpush1.bf16.msra.mxu0 0
    %379 = vmatprep.subr.bf16.mxu0 0
    %380 = vmatpush1.bf16.msra.mxu0 0
    %381 = vmatprep.subr.bf16.mxu0 0
    %382 = vmatpush1.bf16.msra.mxu0 0
    %383 = vmatprep.subr.bf16.mxu0 0
    %384 = vmatpush1.bf16.msra.mxu0 0
    %385 = vmatprep.subr.bf16.mxu0 0
    %386 = vmatpush1.bf16.msra.mxu0 0
    %387 = vmatprep.subr.bf16.mxu0 0
    %388 = vmatpush1.bf16.msra.mxu0 0
    %389 = vmatprep.subr.bf16.mxu0 0
    %390 = vmatpush1.bf16.msra.mxu0 0
    %391 = vmatprep.subr.bf16.mxu0 0
    %392 = vmatpush1.bf16.msra.mxu0 0
    %393 = vmatprep.mubr.bf16.mxu0 0
    %394 = vmatmul.mubr.bf16.gmra.mrb[0].mxu0 %v296
    %v395 = vpop.f32.mrb[0].mxu0
    %v396 = vadd.f32 0.0, %v395
    %v397 = vpop.f32.mrb[0].mxu0
    %v398 = vpop.f32.mrb[0].mxu0
    %v399 = vpop.f32.mrb[0].mxu0
    %400 = vdwg.mxu0
    %v401 = vpack.c.bf16 %v396, %v396
    %v402 = vld [vmem:[%s8] sm:$0x1]
    %v404 = vpack.i.b16 %v402, %v402
    %v406 = vlaneseq
    %v407 = vshrl.u32 %v406, 7
    %v408 = vsub.s32 0, %v407
    %v409 = vrot.slane %v404, %v408
    %v410 = vadd.bf16 %v401, %v409
    %v411 = vmul.bf16 %v410, 1045249613
    %v412 = vmax.bf16 %v410, %v411
    %v413 = vld [vmem:[#allocation7] sm:$0xf]
    %v414 = vld [vmem:[#allocation7 + $0x4] sm:$0xf]
    %v415 = vld [vmem:[#allocation7 + $0x8] sm:$0xf]
    %v416 = vld [vmem:[#allocation7 + $0xc] sm:$0xf]
    %v417 = vld [vmem:[#allocation7 + $0x10] sm:$0xf]
    %v418 = vld [vmem:[#allocation7 + $0x14] sm:$0xf]
    %v419 = vld [vmem:[#allocation7 + $0x18] sm:$0xf]
    %v420 = vld [vmem:[#allocation7 + $0x1c] sm:$0xf]
    %v421 = vld [vmem:[#allocation7 + $0x20] sm:$0xf]
    %v422 = vld [vmem:[#allocation7 + $0x24] sm:$0xf]
    %v423 = vld [vmem:[#allocation7 + $0x28] sm:$0xf]
    %v424 = vld [vmem:[#allocation7 + $0x2c] sm:$0xf]
    %v425 = vld [vmem:[#allocation7 + $0x30] sm:$0xf]
    %v426 = vld [vmem:[#allocation7 + $0x34] sm:$0xf]
    %v427 = vld [vmem:[#allocation7 + $0x38] sm:$0xf]
    %v428 = vld [vmem:[#allocation7 + $0x3c] sm:$0xf]
    %v445 = vunpack.c.l.b16 %v413
    %v446 = vunpack.c.l.b16 %v414
    %v447 = vunpack.c.l.b16 %v415
    %v448 = vunpack.c.l.b16 %v416
    %v449 = vunpack.c.l.b16 %v417
    %v450 = vunpack.c.l.b16 %v418
    %v451 = vunpack.c.l.b16 %v419
    %v452 = vunpack.c.l.b16 %v420
    %v453 = vunpack.c.l.b16 %v421
    %v454 = vunpack.c.l.b16 %v422
    %v455 = vunpack.c.l.b16 %v423
    %v456 = vunpack.c.l.b16 %v424
    %v457 = vunpack.c.l.b16 %v425
    %v458 = vunpack.c.l.b16 %v426
    %v459 = vunpack.c.l.b16 %v427
    %v460 = vunpack.c.l.b16 %v428
    %v461 = vpack.c.b16 %v446, %v445
    %v462 = vpack.c.b16 %v448, %v447
    %v463 = vpack.c.b16 %v450, %v449
    %v464 = vpack.c.b16 %v452, %v451
    %v465 = vpack.c.b16 %v454, %v453
    %v466 = vpack.c.b16 %v456, %v455
    %v467 = vpack.c.b16 %v458, %v457
    %v468 = vpack.c.b16 %v460, %v459
    %477 = vmatprep.subr.bf16.mxu0 0
    %478 = vmatpush1.bf16.msra.mxu0 %v461
    %479 = vmatprep.subr.bf16.mxu0 0
    %480 = vmatpush1.bf16.msra.mxu0 %v462
    %481 = vmatprep.subr.bf16.mxu0 0
    %482 = vmatpush1.bf16.msra.mxu0 %v463
    %483 = vmatprep.subr.bf16.mxu0 0
    %484 = vmatpush1.bf16.msra.mxu0 %v464
    %485 = vmatprep.subr.bf16.mxu0 0
    %486 = vmatpush1.bf16.msra.mxu0 %v465
    %487 = vmatprep.subr.bf16.mxu0 0
    %488 = vmatpush1.bf16.msra.mxu0 %v466
    %489 = vmatprep.subr.bf16.mxu0 0
    %490 = vmatpush1.bf16.msra.mxu0 %v467
    %491 = vmatprep.subr.bf16.mxu0 0
    %492 = vmatpush1.bf16.msra.mxu0 %v468
    %493 = vmatprep.subr.bf16.mxu0 0
    %494 = vmatpush1.bf16.msra.mxu0 0
    %495 = vmatprep.subr.bf16.mxu0 0
    %496 = vmatpush1.bf16.msra.mxu0 0
    %497 = vmatprep.subr.bf16.mxu0 0
    %498 = vmatpush1.bf16.msra.mxu0 0
    %499 = vmatprep.subr.bf16.mxu0 0
    %500 = vmatpush1.bf16.msra.mxu0 0
    %501 = vmatprep.subr.bf16.mxu0 0
    %502 = vmatpush1.bf16.msra.mxu0 0
    %503 = vmatprep.subr.bf16.mxu0 0
    %504 = vmatpush1.bf16.msra.mxu0 0
    %505 = vmatprep.subr.bf16.mxu0 0
    %506 = vmatpush1.bf16.msra.mxu0 0
    %507 = vmatprep.subr.bf16.mxu0 0
    %508 = vmatpush1.bf16.msra.mxu0 0
    %509 = vmatprep.mubr.bf16.mxu0 0
    %510 = vmatmul.mubr.bf16.gmra.mrb[0].mxu0 %v412
    %v511 = vpop.f32.mrb[0].mxu0
    %v512 = vadd.f32 0.0, %v511
    %v513 = vpop.f32.mrb[0].mxu0
    %v514 = vpop.f32.mrb[0].mxu0
    %v515 = vpop.f32.mrb[0].mxu0
    %516 = vdwg.mxu0
    %v517 = vpack.c.bf16 %v512, %v512
    %v518 = vld [vmem:[%s10] sm:$0x1]
    %v520 = vpack.i.b16 %v518, %v518
    %v522 = vlaneseq
    %v523 = vshrl.u32 %v522, 7
    %v524 = vsub.s32 0, %v523
    %v525 = vrot.slane %v520, %v524
    %v526 = vadd.bf16 %v517, %v525
    %v527 = vmul.bf16 %v526, 1045249613
    %v528 = vmax.bf16 %v526, %v527
    %v529 = vunpack.c.l.bf16 %v528
    %v530 = vld [vmem:[%s11] sm:$0x1]
    %v532 = vlaneseq
    %v533 = vshrl.u32 %v532, 7
    %v534 = vsub.s32 0, %v533
    %v535 = vrot.slane %v530, %v534
    %v537 = vmul.f32 %v529, %v535
    %538 = vadd.xlane.f32.xlu0 %v537
    %v539 = vpop.xlane.xlu0 %538
    %s540 = sld [smem:[#allocation2]]
    %v541 = vstv %s540
    %v542 = vadd.f32 %v539, %v541
    %v543 = vsub.f32 0.0, %v542
    %v544 = vmul.f32 %v543, 1.442695
    %v545 = vpow.pop %v544
    %v546 = vadd.f32 %v545, 1.0
    %v547 = vrcp.pop %v546
    %v548 = vmul.f32 1.0, %v547
    %vm549 = vcmask 7168
    %550 = vst.msk [vmem:[%s13] sm:$0xff] %vm549, %v548
    // Predicated region
    $region66: #{tpu_custom_call.1} parent=1 // pred_check
      _
    $region67: #{tpu_custom_call.1} parent=1 // pred_check_branch
      %552 = sbr.rel (0) target = $region69
    $region68: #{tpu_custom_call.1} parent=1 // pred_region
      _
    $region69: #{tpu_custom_call.1} parent=1 // pred_fallthru
      _
    // Predicated region
    $region70: #{tpu_custom_call.1} parent=1 // pred_check
      _
    $region71: #{tpu_custom_call.1} parent=1 // pred_check_branch
      %554 = sbr.rel (0) target = $region73
    $region72: #{tpu_custom_call.1} parent=1 // pred_region
      _
    $region73: #{tpu_custom_call.1} parent=1 // pred_fallthru
      _
    %555 = vsyncpa [#allocation4], 1
    %556 = vsyncpa [#allocation6], 1

// kernel: tpu_custom_call.1
$region0: #{tpu_custom_call.1}
  #allocation0 [shape = 'u32[]', space=smem, size = 0x4, offset = 0x4, fixed_abs, tag = 'smem constant byte address 0x4 - core index']
  #allocation1 [shape = 'u32[144,128]{1,0:T(1,128)}', space=vmem, size = 0x12000, scoped, tag = 'internal scratch']
  #allocation2 [shape = 'f32[1,1]{1,0:T(1,128)S(6)}', space=smem, size = 0x200, scoped, tag = 'scoped memory for tpu_custom_call.1']
  %s0 = inlined_call_operand.vmem [shape: bf16[8,31], index: 0, kind: input, shape index: {}]
  %s1 = inlined_call_operand.vmem [shape: f32[8,1], index: 1, kind: input, shape index: {}]
  %s2 = inlined_call_operand.vmem [shape: bf16[31,128], index: 2, kind: input, shape index: {}]
  %s3 = inlined_call_operand.vmem [shape: f32[1,128], index: 3, kind: input, shape index: {}]
  %s4 = inlined_call_operand.vmem [shape: bf16[1,128], index: 4, kind: input, shape index: {}]
  %s5 = inlined_call_operand.hbm [shape: bf16[128,128], index: 5, kind: input, shape index: {}]
  %s6 = inlined_call_operand.vmem [shape: bf16[1,128], index: 6, kind: input, shape index: {}]
  %s7 = inlined_call_operand.hbm [shape: bf16[128,128], index: 7, kind: input, shape index: {}]
  %s8 = inlined_call_operand.vmem [shape: bf16[1,128], index: 8, kind: input, shape index: {}]
  %s9 = inlined_call_operand.hbm [shape: bf16[128,128], index: 9, kind: input, shape index: {}]
  %s10 = inlined_call_operand.vmem [shape: bf16[1,128], index: 10, kind: input, shape index: {}]
  %s11 = inlined_call_operand.vmem [shape: f32[1,128], index: 11, kind: input, shape index: {}]
  %s12 = inlined_call_operand.<no memory space> [shape: f32[1,1], index: 12, kind: input, shape index: {}]
  %s13 = inlined_call_operand.vmem [shape: f32[8,1], index: 13, kind: output, shape index: {}]
  %s14 = sld [smem:[#allocation0]]
  $region74: #{tpu_custom_call.1} parent=0
    _
  %s16 = ssub.s32 1, %s14
  %s17 = scalar_select 0, %s16, %s14
  %18 = sst [smem:[#allocation2]] %s12
  $region1: #{tpu_custom_call.1} parent=0
    #allocation3 [shape = 'u8[32768]{0}', space=vmem, size = 0x8000, scoped, tag = 'input window, operand 5, single buffered']
    #allocation4 [shape = 's32[1]{0}', space=sflag, size = 0x4, scoped, tag = 'scoped memory for tpu_custom_call.1']
    #allocation5 [shape = 'u8[32768]{0}', space=vmem, size = 0x8000, scoped, tag = 'input window, operand 7, single buffered']
    #allocation6 [shape = 's32[1]{0}', space=sflag, size = 0x4, scoped, tag = 'scoped memory for tpu_custom_call.1']
    #allocation7 [shape = 'u8[32768]{0}', space=vmem, size = 0x8000, scoped, tag = 'input window, operand 9, single buffered']
    %19 = vsyncpa [#allocation4], 0
    %20 = vsyncpa [#allocation6], 0
    // Predicated region
    $region2: #{tpu_custom_call.1} parent=1 // pred_check
      _
    $region3: #{tpu_custom_call.1} parent=1 // pred_check_branch
      %22 = sbr.rel (0) target = $region5
    $region4: #{tpu_custom_call.1} parent=1 // pred_region
      _
    $region5: #{tpu_custom_call.1} parent=1 // pred_fallthru
      _
    // Predicated region
    $region6: #{tpu_custom_call.1} parent=1 // pred_check
      _
    $region7: #{tpu_custom_call.1} parent=1 // pred_check_branch
      %24 = sbr.rel (0) target = $region9
    $region8: #{tpu_custom_call.1} parent=1 // pred_region
      _
    $region9: #{tpu_custom_call.1} parent=1 // pred_fallthru
      _
    // Predicated region
    $region10: #{tpu_custom_call.1} parent=1 // pred_check
      _
    $region11: #{tpu_custom_call.1} parent=1 // pred_check_branch
      %26 = sbr.rel (0) target = $region13
    $region12: #{tpu_custom_call.1} parent=1 // pred_region
      _
    $region13: #{tpu_custom_call.1} parent=1 // pred_fallthru
      _
    // Predicated region
    $region14: #{tpu_custom_call.1} parent=1 // pred_check
      _
    $region15: #{tpu_custom_call.1} parent=1 // pred_check_branch
      %28 = sbr.rel (0) target = $region17
    $region16: #{tpu_custom_call.1} parent=1 // pred_region
      _
    $region17: #{tpu_custom_call.1} parent=1 // pred_fallthru
      _
    // Predicated region
    $region18: #{tpu_custom_call.1} parent=1 // pred_check
      _
    $region19: #{tpu_custom_call.1} parent=1 // pred_check_branch
      %30 = sbr.rel (0) target = $region21
    $region20: #{tpu_custom_call.1} parent=1 // pred_region
      _
    $region21: #{tpu_custom_call.1} parent=1 // pred_fallthru
      _
    // Predicated region
    $region22: #{tpu_custom_call.1} parent=1 // pred_check
      _
    $region23: #{tpu_custom_call.1} parent=1 // pred_check_branch
      %32 = sbr.rel (0) target = $region25
    $region24: #{tpu_custom_call.1} parent=1 // pred_region
      %s34 = ssub.s32 1024, 1024
      %35 = vsyncadd [#allocation4], %s34
      %s36 = sshll.u32 [#allocation3], 4
      %s37 = int_to_ptr.vmem [resolvable:$true] %s36
      %42 = dma.hbm_to_vmem [thread:$0]  %s5, 1024, %s37, [#allocation4], 64, 64, 4
    $region25: #{tpu_custom_call.1} parent=1 // pred_fallthru
      _
    // Predicated region
    $region26: #{tpu_custom_call.1} parent=1 // pred_check
      _
    $region27: #{tpu_custom_call.1} parent=1 // pred_check_branch
      %44 = sbr.rel (0) target = $region29
    $region28: #{tpu_custom_call.1} parent=1 // pred_region
      _
    $region29: #{tpu_custom_call.1} parent=1 // pred_fallthru
      _
    // Predicated region
    $region30: #{tpu_custom_call.1} parent=1 // pred_check
      _
    $region31: #{tpu_custom_call.1} parent=1 // pred_check_branch
      %46 = sbr.rel (0) target = $region33
    $region32: #{tpu_custom_call.1} parent=1 // pred_region
      %s48 = ssub.s32 1024, 1024
      %49 = vsyncadd [#allocation6], %s48
      %s50 = sshll.u32 [#allocation5], 4
      %s51 = int_to_ptr.vmem [resolvable:$true] %s50
      %56 = dma.hbm_to_vmem [thread:$0]  %s7, 1024, %s51, [#allocation6], 64, 64, 4
    $region33: #{tpu_custom_call.1} parent=1 // pred_fallthru
      _
    // Predicated region
    $region34: #{tpu_custom_call.1} parent=1 // pred_check
      _
    $region35: #{tpu_custom_call.1} parent=1 // pred_check_branch
      %58 = sbr.rel (0) target = $region37
    $region36: #{tpu_custom_call.1} parent=1 // pred_region
      _
    $region37: #{tpu_custom_call.1} parent=1 // pred_fallthru
      _
    // Predicated region
    $region38: #{tpu_custom_call.1} parent=1 // pred_check
      _
    $region39: #{tpu_custom_call.1} parent=1 // pred_check_branch
      %60 = sbr.rel (0) target = $region41
    $region40: #{tpu_custom_call.1} parent=1 // pred_region
      %s62 = ssub.s32 1024, 1024
      %63 = vsyncadd [#allocation6], %s62
      %s64 = sshll.u32 [#allocation7], 4
      %s65 = int_to_ptr.vmem [resolvable:$true] %s64
      %70 = dma.hbm_to_vmem [thread:$0]  %s9, 1024, %s65, [#allocation6], 64, 64, 4
    $region41: #{tpu_custom_call.1} parent=1 // pred_fallthru
      _
    // Predicated region
    $region42: #{tpu_custom_call.1} parent=1 // pred_check
      _
    $region43: #{tpu_custom_call.1} parent=1 // pred_check_branch
      %72 = sbr.rel (0) target = $region45
    $region44: #{tpu_custom_call.1} parent=1 // pred_region
      _
    $region45: #{tpu_custom_call.1} parent=1 // pred_fallthru
      _
    // Predicated region
    $region46: #{tpu_custom_call.1} parent=1 // pred_check
      _
    $region47: #{tpu_custom_call.1} parent=1 // pred_check_branch
      %74 = sbr.rel (0) target = $region49
    $region48: #{tpu_custom_call.1} parent=1 // pred_region
      _
    $region49: #{tpu_custom_call.1} parent=1 // pred_fallthru
      _
    // Predicated region
    $region50: #{tpu_custom_call.1} parent=1 // pred_check
      _
    $region51: #{tpu_custom_call.1} parent=1 // pred_check_branch
      %76 = sbr.rel (0) target = $region53
    $region52: #{tpu_custom_call.1} parent=1 // pred_region
      _
    $region53: #{tpu_custom_call.1} parent=1 // pred_fallthru
      _
    // Predicated region
    $region54: #{tpu_custom_call.1} parent=1 // pred_check
      _
    $region55: #{tpu_custom_call.1} parent=1 // pred_check_branch
      %78 = sbr.rel (0) target = $region57
    $region56: #{tpu_custom_call.1} parent=1 // pred_region
      %79 = dma.done [#allocation4], 1024
    $region57: #{tpu_custom_call.1} parent=1 // pred_fallthru
      _
    // Predicated region
    $region58: #{tpu_custom_call.1} parent=1 // pred_check
      _
    $region59: #{tpu_custom_call.1} parent=1 // pred_check_branch
      %81 = sbr.rel (0) target = $region61
    $region60: #{tpu_custom_call.1} parent=1 // pred_region
      %82 = dma.done [#allocation6], 1024
    $region61: #{tpu_custom_call.1} parent=1 // pred_fallthru
      _
    // Predicated region
    $region62: #{tpu_custom_call.1} parent=1 // pred_check
      _
    $region63: #{tpu_custom_call.1} parent=1 // pred_check_branch
      %84 = sbr.rel (0) target = $region65
    $region64: #{tpu_custom_call.1} parent=1 // pred_region
      %85 = dma.done [#allocation6], 1024
    $region65: #{tpu_custom_call.1} parent=1 // pred_fallthru
      _
    %v88 = vld [vmem:[%s0] sm:$0xf]
    %v89 = vld [vmem:[%s1] sm:$0xff]
    %v90 = vld [vmem:[%s2] sm:$0xf]
    %v91 = vld [vmem:[%s2 + $0x4] sm:$0xf]
    %v92 = vld [vmem:[%s2 + $0x8] sm:$0xf]
    %v93 = vld [vmem:[%s2 + $0xc] sm:$0xf]
    %v94 = vld [vmem:[%s3] sm:$0x1]
    %96 = vset.pattern.permute.xlu0 0
    %97 = vperm.xlu0 %96, %v89
    %v98 = vpop.permute.xlu0 %97
    %v101 = vlaneseq
    %v102 = vshrl.u32 %v101, 7
    %v103 = vsub.s32 0, %v102
    %v104 = vrot.slane %v94, %v103
    %v106 = vmul.f32 %v98, %v104
    %v111 = vunpack.c.l.b16 %v90
    %v112 = vunpack.c.l.b16 %v91
    %v113 = vunpack.c.l.b16 %v92
    %v114 = vunpack.c.l.b16 %v93
    %v115 = vpack.c.b16 %v112, %v111
    %v116 = vpack.c.b16 %v114, %v113
    %vm118 = vcmask 252928
    %v120 = vsel %vm118, %v88, 0
    %vm122 = vcmask 1046528
    %vm123 = vcmask 1047552
    %v124 = vsel %vm122, 4294967295, 65535
    %v125 = vsel %vm123, %v124, 0
    %v127 = vand.u32 %v116, %v125
    %129 = vmatprep.subr.bf16.mxu0 0
    %130 = vmatpush1.bf16.msra.mxu0 %v115
    %131 = vmatprep.subr.bf16.mxu0 0
    %132 = vmatpush1.bf16.msra.mxu0 %v127
    %133 = vmatprep.subr.bf16.mxu0 0
    %134 = vmatpush1.bf16.msra.mxu0 0
    %135 = vmatprep.subr.bf16.mxu0 0
    %136 = vmatpush1.bf16.msra.mxu0 0
    %137 = vmatprep.subr.bf16.mxu0 0
    %138 = vmatpush1.bf16.msra.mxu0 0
    %139 = vmatprep.subr.bf16.mxu0 0
    %140 = vmatpush1.bf16.msra.mxu0 0
    %141 = vmatprep.subr.bf16.mxu0 0
    %142 = vmatpush1.bf16.msra.mxu0 0
    %143 = vmatprep.subr.bf16.mxu0 0
    %144 = vmatpush1.bf16.msra.mxu0 0
    %145 = vmatprep.subr.bf16.mxu0 0
    %146 = vmatpush1.bf16.msra.mxu0 0
    %147 = vmatprep.subr.bf16.mxu0 0
    %148 = vmatpush1.bf16.msra.mxu0 0
    %149 = vmatprep.subr.bf16.mxu0 0
    %150 = vmatpush1.bf16.msra.mxu0 0
    %151 = vmatprep.subr.bf16.mxu0 0
    %152 = vmatpush1.bf16.msra.mxu0 0
    %153 = vmatprep.subr.bf16.mxu0 0
    %154 = vmatpush1.bf16.msra.mxu0 0
    %155 = vmatprep.subr.bf16.mxu0 0
    %156 = vmatpush1.bf16.msra.mxu0 0
    %157 = vmatprep.subr.bf16.mxu0 0
    %158 = vmatpush1.bf16.msra.mxu0 0
    %159 = vmatprep.subr.bf16.mxu0 0
    %160 = vmatpush1.bf16.msra.mxu0 0
    %161 = vmatprep.mubr.bf16.mxu0 0
    %162 = vmatmul.mubr.bf16.gmra.mrb[0].mxu0 %v120
    %v163 = vpop.f32.mrb[0].mxu0
    %v164 = vadd.f32 %v106, %v163
    %v165 = vpop.f32.mrb[0].mxu0
    %v166 = vpop.f32.mrb[0].mxu0
    %v167 = vpop.f32.mrb[0].mxu0
    %168 = vdwg.mxu0
    %v169 = vpack.c.bf16 %v164, %v164
    %v170 = vld [vmem:[%s4] sm:$0x1]
    %v172 = vpack.i.b16 %v170, %v170
    %v174 = vlaneseq
    %v175 = vshrl.u32 %v174, 7
    %v176 = vsub.s32 0, %v175
    %v177 = vrot.slane %v172, %v176
    %v178 = vadd.bf16 %v169, %v177
    %v179 = vmul.bf16 %v178, 1045249613
    %v180 = vmax.bf16 %v178, %v179
    %v181 = vld [vmem:[#allocation3] sm:$0xf]
    %v182 = vld [vmem:[#allocation3 + $0x4] sm:$0xf]
    %v183 = vld [vmem:[#allocation3 + $0x8] sm:$0xf]
    %v184 = vld [vmem:[#allocation3 + $0xc] sm:$0xf]
    %v185 = vld [vmem:[#allocation3 + $0x10] sm:$0xf]
    %v186 = vld [vmem:[#allocation3 + $0x14] sm:$0xf]
    %v187 = vld [vmem:[#allocation3 + $0x18] sm:$0xf]
    %v188 = vld [vmem:[#allocation3 + $0x1c] sm:$0xf]
    %v189 = vld [vmem:[#allocation3 + $0x20] sm:$0xf]
    %v190 = vld [vmem:[#allocation3 + $0x24] sm:$0xf]
    %v191 = vld [vmem:[#allocation3 + $0x28] sm:$0xf]
    %v192 = vld [vmem:[#allocation3 + $0x2c] sm:$0xf]
    %v193 = vld [vmem:[#allocation3 + $0x30] sm:$0xf]
    %v194 = vld [vmem:[#allocation3 + $0x34] sm:$0xf]
    %v195 = vld [vmem:[#allocation3 + $0x38] sm:$0xf]
    %v196 = vld [vmem:[#allocation3 + $0x3c] sm:$0xf]
    %v213 = vunpack.c.l.b16 %v181
    %v214 = vunpack.c.l.b16 %v182
    %v215 = vunpack.c.l.b16 %v183
    %v216 = vunpack.c.l.b16 %v184
    %v217 = vunpack.c.l.b16 %v185
    %v218 = vunpack.c.l.b16 %v186
    %v219 = vunpack.c.l.b16 %v187
    %v220 = vunpack.c.l.b16 %v188
    %v221 = vunpack.c.l.b16 %v189
    %v222 = vunpack.c.l.b16 %v190
    %v223 = vunpack.c.l.b16 %v191
    %v224 = vunpack.c.l.b16 %v192
    %v225 = vunpack.c.l.b16 %v193
    %v226 = vunpack.c.l.b16 %v194
    %v227 = vunpack.c.l.b16 %v195
    %v228 = vunpack.c.l.b16 %v196
    %v229 = vpack.c.b16 %v214, %v213
    %v230 = vpack.c.b16 %v216, %v215
    %v231 = vpack.c.b16 %v218, %v217
    %v232 = vpack.c.b16 %v220, %v219
    %v233 = vpack.c.b16 %v222, %v221
    %v234 = vpack.c.b16 %v224, %v223
    %v235 = vpack.c.b16 %v226, %v225
    %v236 = vpack.c.b16 %v228, %v227
    %245 = vmatprep.subr.bf16.mxu0 0
    %246 = vmatpush1.bf16.msra.mxu0 %v229
    %247 = vmatprep.subr.bf16.mxu0 0
    %248 = vmatpush1.bf16.msra.mxu0 %v230
    %249 = vmatprep.subr.bf16.mxu0 0
    %250 = vmatpush1.bf16.msra.mxu0 %v231
    %251 = vmatprep.subr.bf16.mxu0 0
    %252 = vmatpush1.bf16.msra.mxu0 %v232
    %253 = vmatprep.subr.bf16.mxu0 0
    %254 = vmatpush1.bf16.msra.mxu0 %v233
    %255 = vmatprep.subr.bf16.mxu0 0
    %256 = vmatpush1.bf16.msra.mxu0 %v234
    %257 = vmatprep.subr.bf16.mxu0 0
    %258 = vmatpush1.bf16.msra.mxu0 %v235
    %259 = vmatprep.subr.bf16.mxu0 0
    %260 = vmatpush1.bf16.msra.mxu0 %v236
    %261 = vmatprep.subr.bf16.mxu0 0
    %262 = vmatpush1.bf16.msra.mxu0 0
    %263 = vmatprep.subr.bf16.mxu0 0
    %264 = vmatpush1.bf16.msra.mxu0 0
    %265 = vmatprep.subr.bf16.mxu0 0
    %266 = vmatpush1.bf16.msra.mxu0 0
    %267 = vmatprep.subr.bf16.mxu0 0
    %268 = vmatpush1.bf16.msra.mxu0 0
    %269 = vmatprep.subr.bf16.mxu0 0
    %270 = vmatpush1.bf16.msra.mxu0 0
    %271 = vmatprep.subr.bf16.mxu0 0
    %272 = vmatpush1.bf16.msra.mxu0 0
    %273 = vmatprep.subr.bf16.mxu0 0
    %274 = vmatpush1.bf16.msra.mxu0 0
    %275 = vmatprep.subr.bf16.mxu0 0
    %276 = vmatpush1.bf16.msra.mxu0 0
    %277 = vmatprep.mubr.bf16.mxu0 0
    %278 = vmatmul.mubr.bf16.gmra.mrb[0].mxu0 %v180
    %v279 = vpop.f32.mrb[0].mxu0
    %v280 = vadd.f32 0.0, %v279
    %v281 = vpop.f32.mrb[0].mxu0
    %v282 = vpop.f32.mrb[0].mxu0
    %v283 = vpop.f32.mrb[0].mxu0
    %284 = vdwg.mxu0
    %v285 = vpack.c.bf16 %v280, %v280
    %v286 = vld [vmem:[%s6] sm:$0x1]
    %v288 = vpack.i.b16 %v286, %v286
    %v290 = vlaneseq
    %v291 = vshrl.u32 %v290, 7
    %v292 = vsub.s32 0, %v291
    %v293 = vrot.slane %v288, %v292
    %v294 = vadd.bf16 %v285, %v293
    %v295 = vmul.bf16 %v294, 1045249613
    %v296 = vmax.bf16 %v294, %v295
    %v297 = vld [vmem:[#allocation5] sm:$0xf]
    %v298 = vld [vmem:[#allocation5 + $0x4] sm:$0xf]
    %v299 = vld [vmem:[#allocation5 + $0x8] sm:$0xf]
    %v300 = vld [vmem:[#allocation5 + $0xc] sm:$0xf]
    %v301 = vld [vmem:[#allocation5 + $0x10] sm:$0xf]
    %v302 = vld [vmem:[#allocation5 + $0x14] sm:$0xf]
    %v303 = vld [vmem:[#allocation5 + $0x18] sm:$0xf]
    %v304 = vld [vmem:[#allocation5 + $0x1c] sm:$0xf]
    %v305 = vld [vmem:[#allocation5 + $0x20] sm:$0xf]
    %v306 = vld [vmem:[#allocation5 + $0x24] sm:$0xf]
    %v307 = vld [vmem:[#allocation5 + $0x28] sm:$0xf]
    %v308 = vld [vmem:[#allocation5 + $0x2c] sm:$0xf]
    %v309 = vld [vmem:[#allocation5 + $0x30] sm:$0xf]
    %v310 = vld [vmem:[#allocation5 + $0x34] sm:$0xf]
    %v311 = vld [vmem:[#allocation5 + $0x38] sm:$0xf]
    %v312 = vld [vmem:[#allocation5 + $0x3c] sm:$0xf]
    %v329 = vunpack.c.l.b16 %v297
    %v330 = vunpack.c.l.b16 %v298
    %v331 = vunpack.c.l.b16 %v299
    %v332 = vunpack.c.l.b16 %v300
    %v333 = vunpack.c.l.b16 %v301
    %v334 = vunpack.c.l.b16 %v302
    %v335 = vunpack.c.l.b16 %v303
    %v336 = vunpack.c.l.b16 %v304
    %v337 = vunpack.c.l.b16 %v305
    %v338 = vunpack.c.l.b16 %v306
    %v339 = vunpack.c.l.b16 %v307
    %v340 = vunpack.c.l.b16 %v308
    %v341 = vunpack.c.l.b16 %v309
    %v342 = vunpack.c.l.b16 %v310
    %v343 = vunpack.c.l.b16 %v311
    %v344 = vunpack.c.l.b16 %v312
    %v345 = vpack.c.b16 %v330, %v329
    %v346 = vpack.c.b16 %v332, %v331
    %v347 = vpack.c.b16 %v334, %v333
    %v348 = vpack.c.b16 %v336, %v335
    %v349 = vpack.c.b16 %v338, %v337
    %v350 = vpack.c.b16 %v340, %v339
    %v351 = vpack.c.b16 %v342, %v341
    %v352 = vpack.c.b16 %v344, %v343
    %361 = vmatprep.subr.bf16.mxu0 0
    %362 = vmatpush1.bf16.msra.mxu0 %v345
    %363 = vmatprep.subr.bf16.mxu0 0
    %364 = vmatpush1.bf16.msra.mxu0 %v346
    %365 = vmatprep.subr.bf16.mxu0 0
    %366 = vmatpush1.bf16.msra.mxu0 %v347
    %367 = vmatprep.subr.bf16.mxu0 0
    %368 = vmatpush1.bf16.msra.mxu0 %v348
    %369 = vmatprep.subr.bf16.mxu0 0
    %370 = vmatpush1.bf16.msra.mxu0 %v349
    %371 = vmatprep.subr.bf16.mxu0 0
    %372 = vmatpush1.bf16.msra.mxu0 %v350
    %373 = vmatprep.subr.bf16.mxu0 0
    %374 = vmatpush1.bf16.msra.mxu0 %v351
    %375 = vmatprep.subr.bf16.mxu0 0
    %376 = vmatpush1.bf16.msra.mxu0 %v352
    %377 = vmatprep.subr.bf16.mxu0 0
    %378 = vmatpush1.bf16.msra.mxu0 0
    %379 = vmatprep.subr.bf16.mxu0 0
    %380 = vmatpush1.bf16.msra.mxu0 0
    %381 = vmatprep.subr.bf16.mxu0 0
    %382 = vmatpush1.bf16.msra.mxu0 0
    %383 = vmatprep.subr.bf16.mxu0 0
    %384 = vmatpush1.bf16.msra.mxu0 0
    %385 = vmatprep.subr.bf16.mxu0 0
    %386 = vmatpush1.bf16.msra.mxu0 0
    %387 = vmatprep.subr.bf16.mxu0 0
    %388 = vmatpush1.bf16.msra.mxu0 0
    %389 = vmatprep.subr.bf16.mxu0 0
    %390 = vmatpush1.bf16.msra.mxu0 0
    %391 = vmatprep.subr.bf16.mxu0 0
    %392 = vmatpush1.bf16.msra.mxu0 0
    %393 = vmatprep.mubr.bf16.mxu0 0
    %394 = vmatmul.mubr.bf16.gmra.mrb[0].mxu0 %v296
    %v395 = vpop.f32.mrb[0].mxu0
    %v396 = vadd.f32 0.0, %v395
    %v397 = vpop.f32.mrb[0].mxu0
    %v398 = vpop.f32.mrb[0].mxu0
    %v399 = vpop.f32.mrb[0].mxu0
    %400 = vdwg.mxu0
    %v401 = vpack.c.bf16 %v396, %v396
    %v402 = vld [vmem:[%s8] sm:$0x1]
    %v404 = vpack.i.b16 %v402, %v402
    %v406 = vlaneseq
    %v407 = vshrl.u32 %v406, 7
    %v408 = vsub.s32 0, %v407
    %v409 = vrot.slane %v404, %v408
    %v410 = vadd.bf16 %v401, %v409
    %v411 = vmul.bf16 %v410, 1045249613
    %v412 = vmax.bf16 %v410, %v411
    %v413 = vld [vmem:[#allocation7] sm:$0xf]
    %v414 = vld [vmem:[#allocation7 + $0x4] sm:$0xf]
    %v415 = vld [vmem:[#allocation7 + $0x8] sm:$0xf]
    %v416 = vld [vmem:[#allocation7 + $0xc] sm:$0xf]
    %v417 = vld [vmem:[#allocation7 + $0x10] sm:$0xf]
    %v418 = vld [vmem:[#allocation7 + $0x14] sm:$0xf]
    %v419 = vld [vmem:[#allocation7 + $0x18] sm:$0xf]
    %v420 = vld [vmem:[#allocation7 + $0x1c] sm:$0xf]
    %v421 = vld [vmem:[#allocation7 + $0x20] sm:$0xf]
    %v422 = vld [vmem:[#allocation7 + $0x24] sm:$0xf]
    %v423 = vld [vmem:[#allocation7 + $0x28] sm:$0xf]
    %v424 = vld [vmem:[#allocation7 + $0x2c] sm:$0xf]
    %v425 = vld [vmem:[#allocation7 + $0x30] sm:$0xf]
    %v426 = vld [vmem:[#allocation7 + $0x34] sm:$0xf]
    %v427 = vld [vmem:[#allocation7 + $0x38] sm:$0xf]
    %v428 = vld [vmem:[#allocation7 + $0x3c] sm:$0xf]
    %v445 = vunpack.c.l.b16 %v413
    %v446 = vunpack.c.l.b16 %v414
    %v447 = vunpack.c.l.b16 %v415
    %v448 = vunpack.c.l.b16 %v416
    %v449 = vunpack.c.l.b16 %v417
    %v450 = vunpack.c.l.b16 %v418
    %v451 = vunpack.c.l.b16 %v419
    %v452 = vunpack.c.l.b16 %v420
    %v453 = vunpack.c.l.b16 %v421
    %v454 = vunpack.c.l.b16 %v422
    %v455 = vunpack.c.l.b16 %v423
    %v456 = vunpack.c.l.b16 %v424
    %v457 = vunpack.c.l.b16 %v425
    %v458 = vunpack.c.l.b16 %v426
    %v459 = vunpack.c.l.b16 %v427
    %v460 = vunpack.c.l.b16 %v428
    %v461 = vpack.c.b16 %v446, %v445
    %v462 = vpack.c.b16 %v448, %v447
    %v463 = vpack.c.b16 %v450, %v449
    %v464 = vpack.c.b16 %v452, %v451
    %v465 = vpack.c.b16 %v454, %v453
    %v466 = vpack.c.b16 %v456, %v455
    %v467 = vpack.c.b16 %v458, %v457
    %v468 = vpack.c.b16 %v460, %v459
    %477 = vmatprep.subr.bf16.mxu0 0
    %478 = vmatpush1.bf16.msra.mxu0 %v461
    %479 = vmatprep.subr.bf16.mxu0 0
    %480 = vmatpush1.bf16.msra.mxu0 %v462
    %481 = vmatprep.subr.bf16.mxu0 0
    %482 = vmatpush1.bf16.msra.mxu0 %v463
    %483 = vmatprep.subr.bf16.mxu0 0
    %484 = vmatpush1.bf16.msra.mxu0 %v464
    %485 = vmatprep.subr.bf16.mxu0 0
    %486 = vmatpush1.bf16.msra.mxu0 %v465
    %487 = vmatprep.subr.bf16.mxu0 0
    %488 = vmatpush1.bf16.msra.mxu0 %v466
    %489 = vmatprep.subr.bf16.mxu0 0
    %490 = vmatpush1.bf16.msra.mxu0 %v467
    %491 = vmatprep.subr.bf16.mxu0 0
    %492 = vmatpush1.bf16.msra.mxu0 %v468
    %493 = vmatprep.subr.bf16.mxu0 0
    %494 = vmatpush1.bf16.msra.mxu0 0
    %495 = vmatprep.subr.bf16.mxu0 0
    %496 = vmatpush1.bf16.msra.mxu0 0
    %497 = vmatprep.subr.bf16.mxu0 0
    %498 = vmatpush1.bf16.msra.mxu0 0
    %499 = vmatprep.subr.bf16.mxu0 0
    %500 = vmatpush1.bf16.msra.mxu0 0
    %501 = vmatprep.subr.bf16.mxu0 0
    %502 = vmatpush1.bf16.msra.mxu0 0
    %503 = vmatprep.subr.bf16.mxu0 0
    %504 = vmatpush1.bf16.msra.mxu0 0
    %505 = vmatprep.subr.bf16.mxu0 0
    %506 = vmatpush1.bf16.msra.mxu0 0
    %507 = vmatprep.subr.bf16.mxu0 0
    %508 = vmatpush1.bf16.msra.mxu0 0
    %509 = vmatprep.mubr.bf16.mxu0 0
    %510 = vmatmul.mubr.bf16.gmra.mrb[0].mxu0 %v412
    %v511 = vpop.f32.mrb[0].mxu0
    %v512 = vadd.f32 0.0, %v511
    %v513 = vpop.f32.mrb[0].mxu0
    %v514 = vpop.f32.mrb[0].mxu0
    %v515 = vpop.f32.mrb[0].mxu0
    %516 = vdwg.mxu0
    %v517 = vpack.c.bf16 %v512, %v512
    %v518 = vld [vmem:[%s10] sm:$0x1]
    %v520 = vpack.i.b16 %v518, %v518
    %v522 = vlaneseq
    %v523 = vshrl.u32 %v522, 7
    %v524 = vsub.s32 0, %v523
    %v525 = vrot.slane %v520, %v524
    %v526 = vadd.bf16 %v517, %v525
    %v527 = vmul.bf16 %v526, 1045249613
    %v528 = vmax.bf16 %v526, %v527
    %v529 = vunpack.c.l.bf16 %v528
    %v530 = vld [vmem:[%s11] sm:$0x1]
    %v532 = vlaneseq
    %v533 = vshrl.u32 %v532, 7
    %v534 = vsub.s32 0, %v533
    %v535 = vrot.slane %v530, %v534
    %v537 = vmul.f32 %v529, %v535
    %538 = vadd.xlane.f32.xlu0 %v537
    %v539 = vpop.xlane.xlu0 %538
    %s540 = sld [smem:[#allocation2]]
    %v541 = vstv %s540
    %v542 = vadd.f32 %v539, %v541
    %v543 = vsub.f32 0.0, %v542
    %v544 = vmul.f32 %v543, 1.442695
    %v545 = vpow.pop %v544
    %v546 = vadd.f32 %v545, 1.0
    %v547 = vrcp.pop %v546
    %v548 = vmul.f32 1.0, %v547
    %vm549 = vcmask 7168
    %550 = vst.msk [vmem:[%s13] sm:$0xff] %vm549, %v548
    // Predicated region
    $region66: #{tpu_custom_call.1} parent=1 // pred_check
      _
    $region67: #{tpu_custom_call.1} parent=1 // pred_check_branch
      %552 = sbr.rel (0) target = $region69
    $region68: #{tpu_custom_call.1} parent=1 // pred_region
      _
    $region69: #{tpu_custom_call.1} parent=1 // pred_fallthru
      _
    // Predicated region
    $region70: #{tpu_custom_call.1} parent=1 // pred_check
      _
    $region71: #{tpu_custom_call.1} parent=1 // pred_check_branch
      %554 = sbr.rel (0) target = $region73
    $region72: #{tpu_custom_call.1} parent=1 // pred_region
      _
    $region73: #{tpu_custom_call.1} parent=1 // pred_fallthru
      _
    %555 = vsyncpa [#allocation4], 1
    %556 = vsyncpa [#allocation6], 1

</llo_original>
